<compile_context>
chip_gen: v6e
topology: v6e:2x2x1
jax: 0.10.0
libtpu: 0.0.40
codegen_flags: <defaults>
</compile_context>

<pallas_src>
import functools

import jax
import jax.numpy as jnp
from jax.experimental import pallas as pl
from jax.experimental.pallas import tpu as pltpu


# ----------------------------------------------------------------------------
# Fused APPM kernel (one batch element per grid step)
# ----------------------------------------------------------------------------
def _appm_kernel(x_ref,
                 wf_ref, bf_ref,          # fused conv_l0 + conv_l1_0 + conv_l2_0
                 w11_ref, b11_ref,        # conv_l1_1 (dil=1)
                 w21_ref, b21_ref,        # conv_l2_1 (dil=1)
                 wp_ref, bp_ref,          # project_l (1x1)
                 o_ref,
                 *, H, W):
    """x_ref: (1, Cin, H*W).  Weights are BN-folded, laid out (Cout, K)."""
    HW = H * W
    Cin = x_ref.shape[1]
    Cmid = b11_ref.shape[0]
    Cout = bp_ref.shape[0]

    x = x_ref[0]                                           # (Cin, HW)

    # Column index along the flattened spatial axis (for W-boundary masks).
    col = jax.lax.broadcasted_iota(jnp.int32, (1, HW), 1) % W

    def shift_flat(a, off):
        """y[:, p] = a[:, p + off] if 0 <= p+off < HW else 0 (no wraparound)."""
        if off == 0:
            return a
        c = a.shape[0]
        z = jnp.zeros((c, abs(off)), a.dtype)
        if off > 0:
            return jnp.concatenate([a[:, off:], z], axis=1)
        return jnp.concatenate([z, a[:, :HW + off]], axis=1)

    def tap(a, d, kh, kw):
        """Shifted image for tap (kh, kw) of a 3x3 conv, dilation=padding=d."""
        dh, dw = (kh - 1) * d, (kw - 1) * d
        s = shift_flat(a, dh * W + dw)
        # Row out-of-range is already zero (non-wrapping shift); only the
        # W-boundary cross-row contamination needs masking.
        if dw > 0:
            s = jnp.where(col < W - dw, s, 0.0)
        elif dw < 0:
            s = jnp.where(col >= -dw, s, 0.0)
        return s

    def conv3x3(a, d, w_ref, b_ref):
        parts = [tap(a, d, kh, kw) for kh in range(3) for kw in range(3)]
        patch = jnp.concatenate(parts, axis=0)             # (9*C, HW)
        acc = jnp.dot(w_ref[...], patch, preferred_element_type=jnp.float32)
        return jnp.maximum(acc + b_ref[...], 0.0)          # folded-BN bias+ReLU

    # ---- Stage 1: conv_l0 (1x1) + conv_l1_0 (dil=2) + conv_l2_0 (dil=4),
    #      all from one shared im2col patch and ONE matmul.
    parts = []
    for kh in range(3):
        for kw in range(3):
            parts.append(tap(x, 2, kh, kw))                # dil=2 slot
            parts.append(tap(x, 4, kh, kw))                # dil=4 slot
    patch1 = jnp.concatenate(parts, axis=0)                # (18*Cin, HW)
    acc1 = jnp.dot(wf_ref[...], patch1, preferred_element_type=jnp.float32)
    acc1 = jnp.maximum(acc1 + bf_ref[...], 0.0)            # (3*Cmid, HW)
    out0 = acc1[:Cmid]
    out1_pre = acc1[Cmid:2 * Cmid]
    out2_pre = acc1[2 * Cmid:]

    # ---- Stage 2/3: the two sequential dil=1 convs.
    out1 = conv3x3(out0 + out1_pre, 1, w11_ref, b11_ref)
    out2 = conv3x3(out1 + out2_pre, 1, w21_ref, b21_ref)

    # ---- Channel concat + project_l (1x1).
    cat = jnp.concatenate([out0, out1, out2], axis=0)      # (3*Cmid, HW)
    outp = jnp.dot(wp_ref[...], cat, preferred_element_type=jnp.float32)
    outp = jnp.maximum(outp + bp_ref[...], 0.0)            # (Cout, HW)

    o_ref[...] = outp.reshape(1, Cout, HW)                 # lane-dense store


# ----------------------------------------------------------------------------
# Offline parameter packing (BN fold + matmul weight layouts)
# ----------------------------------------------------------------------------
def _fold(p):
    """Fold eval-mode BN scale into the conv weight; return (w_scaled, bias)."""
    w = p["w"].astype(jnp.float32)                         # HWIO
    scale = p["scale"].reshape(-1).astype(jnp.float32)
    bias = p["bias"].reshape(-1).astype(jnp.float32)
    return w * scale[None, None, None, :], bias


def pack_appm_params(params):
    w0f, b0 = _fold(params["l0"])          # (1,1,Cin,Cmid)
    w2f, b10 = _fold(params["l1_0"])       # (3,3,Cin,Cmid)
    w4f, b20 = _fold(params["l2_0"])       # (3,3,Cin,Cmid)
    Cin, Cmid = w2f.shape[2], w2f.shape[3]

    # Fused stage-1 weight: (3*Cmid, 18*Cin).  Patch rows are
    # [tap t: (dil2 channels, dil4 channels)] for t = kh*3+kw.
    w0_mat = w0f.reshape(Cin, Cmid).T                          # (Cmid, Cin)
    w2_tc = jnp.transpose(w2f, (3, 0, 1, 2)).reshape(Cmid, 9, Cin)
    w4_tc = jnp.transpose(w4f, (3, 0, 1, 2)).reshape(Cmid, 9, Cin)
    z = jnp.zeros((Cmid, 9, Cin), jnp.float32)
    rows0 = jnp.concatenate([z.at[:, 4, :].set(w0_mat), z], axis=2)  # 1x1 on center tap
    rows1 = jnp.concatenate([w2_tc, z], axis=2)                      # dil=2 slots
    rows2 = jnp.concatenate([z, w4_tc], axis=2)                      # dil=4 slots
    wf = jnp.concatenate([rows0, rows1, rows2], axis=0).reshape(3 * Cmid, 18 * Cin)
    bf = jnp.concatenate([b0, b10, b20]).reshape(3 * Cmid, 1)

    def pack3x3(p):
        w, b = _fold(p)
        KH, KW, C, Co = w.shape
        wm = jnp.transpose(w, (3, 0, 1, 2)).reshape(Co, KH * KW * C)
        return wm, b.reshape(Co, 1)

    def pack1x1(p):
        w, b = _fold(p)
        C, Co = w.shape[2], w.shape[3]
        return w.reshape(C, Co).T, b.reshape(Co, 1)

    return dict(stage1=(wf, bf),
                l1_1=pack3x3(params["l1_1"]),
                l2_1=pack3x3(params["l2_1"]),
                proj=pack1x1(params["proj"]))


# ----------------------------------------------------------------------------
# Wrapper
# ----------------------------------------------------------------------------
def appm_forward(x_nchw, packed):
    """APPM forward. x_nchw: (N, Cin, H, W) float32 -> (N, Cout, H, W)."""
    N, Cin, H, W = x_nchw.shape
    HW = H * W
    x = x_nchw.reshape(N, Cin, HW).astype(jnp.float32)      # free reshape

    wf, bf = packed["stage1"]
    w11, b11 = packed["l1_1"]
    w21, b21 = packed["l2_1"]
    wp, bp = packed["proj"]
    Cout = bp.shape[0]

    def full(a):
        nd = a.ndim
        return pl.BlockSpec(a.shape, lambda b, _nd=nd: (0,) * _nd)

    out = pl.pallas_call(
        functools.partial(_appm_kernel, H=H, W=W),
        out_shape=jax.ShapeDtypeStruct((N, Cout, HW), jnp.float32),
        grid_spec=pltpu.PrefetchScalarGridSpec(
            num_scalar_prefetch=0,
            grid=(N,),
            in_specs=[
                pl.BlockSpec((1, Cin, HW), lambda b: (b, 0, 0)),
                full(wf), full(bf),
                full(w11), full(b11),
                full(w21), full(b21),
                full(wp), full(bp),
            ],
            out_specs=pl.BlockSpec((1, Cout, HW), lambda b: (b, 0, 0)),
        ),
        compiler_params=pltpu.CompilerParams(
            dimension_semantics=("parallel",)),   # v7x: one batch elem per TC
    )(x, wf, bf, w11, b11, w21, b21, wp, bp)

    return out.reshape(N, Cout, H, W)                        # free reshape


# ----------------------------------------------------------------------------
# Parameter construction (deterministic, synthetic — mimics ConvModule shapes)
# ----------------------------------------------------------------------------
def make_conv_bn_params(key, cin, cout, k):
    kw_, kg, kb, km, kv = jax.random.split(key, 5)
    w = jax.random.normal(kw_, (k, k, cin, cout), jnp.float32) / jnp.sqrt(
        float(k * k * cin))
    gamma = 1.0 + 0.1 * jax.random.normal(kg, (cout,), jnp.float32)
    beta = 0.1 * jax.random.normal(kb, (cout,), jnp.float32)
    r_mean = 0.1 * jax.random.normal(km, (cout,), jnp.float32)
    r_var = jnp.abs(jax.random.normal(kv, (cout,), jnp.float32)) + 0.5
    eps = 1e-5
    scale = gamma / jnp.sqrt(r_var + eps)          # folded eval-mode BN
    bias = beta - r_mean * scale
    return dict(w=w,
                scale=scale.reshape(1, cout),
                bias=bias.reshape(1, cout))


def make_appm_params(key, in_ch, mid_ch, out_ch):
    keys = jax.random.split(key, 6)
    return dict(
        l0=make_conv_bn_params(keys[0], in_ch, mid_ch, 1),
        l1_0=make_conv_bn_params(keys[1], in_ch, mid_ch, 3),
        l1_1=make_conv_bn_params(keys[2], mid_ch, mid_ch, 3),
        l2_0=make_conv_bn_params(keys[3], in_ch, mid_ch, 3),
        l2_1=make_conv_bn_params(keys[4], mid_ch, mid_ch, 3),
        proj=make_conv_bn_params(keys[5], mid_ch * 3, out_ch, 1),
    )


# ----------------------------------------------------------------------------
# Pure-JAX reference (for correctness check)
# ----------------------------------------------------------------------------
def _ref_cbr(x, p, dilation, padding):
    y = jax.lax.conv_general_dilated(
        x, p["w"], window_strides=(1, 1),
        padding=((padding, padding), (padding, padding)),
        rhs_dilation=(dilation, dilation),
        dimension_numbers=("NHWC", "HWIO", "NHWC"))
    y = y * p["scale"].reshape(1, 1, 1, -1) + p["bias"].reshape(1, 1, 1, -1)
    return jnp.maximum(y, 0.0)


def appm_forward_ref(x_nchw, params):
    x = jnp.transpose(x_nchw, (0, 2, 3, 1))
    out0 = _ref_cbr(x, params["l0"], 1, 0)
    out1_pre = _ref_cbr(x, params["l1_0"], 2, 2)
    out1 = _ref_cbr(out0 + out1_pre, params["l1_1"], 1, 1)
    out2_pre = _ref_cbr(x, params["l2_0"], 4, 4)
    out2 = _ref_cbr(out1 + out2_pre, params["l2_1"], 1, 1)
    cat = jnp.concatenate([out0, out1, out2], axis=-1)
    out = _ref_cbr(cat, params["proj"], 1, 0)
    return jnp.transpose(out, (0, 3, 1, 2))


if __name__ == "__main__":
    # Small shapes consistent with the module: N=2, C_in=4, H=W=16,
    # mid_channels=8, out_channels=8.
    N, C_IN, H, W = 2, 4, 16, 16
    MID, OUT = 8, 8

    key = jax.random.PRNGKey(0)
    kx, kp = jax.random.split(key)
    x = jax.random.normal(kx, (N, C_IN, H, W), jnp.float32)
    params = make_appm_params(kp, C_IN, MID, OUT)
    packed = pack_appm_params(params)      # offline BN fold + weight packing

    # TODO(synk): training-mode BatchNorm (batch statistics) is not modeled;
    # the kernel implements the eval-mode folded affine, matching the ref.
    fwd = jax.jit(appm_forward)
    out = jax.block_until_ready(fwd(x, packed))

    ref = jax.block_until_ready(appm_forward_ref(x, params))
    assert out.shape == (N, OUT, H, W), out.shape
    err = float(jnp.max(jnp.abs(out - ref)))
    assert jnp.allclose(out, ref, atol=1e-4, rtol=1e-4), err

    print("KERNEL_OK")
</pallas_src>

<mosaic_0001>
module attributes {stable_mosaic.version = 11 : i64} {
  func.func @_appm_kernel(%arg0: i32, %arg1: memref<1x4x256xf32, #tpu.memory_space<vmem>>, %arg2: memref<24x72xf32, #tpu.memory_space<vmem>>, %arg3: memref<24x1xf32, #tpu.memory_space<vmem>>, %arg4: memref<8x72xf32, #tpu.memory_space<vmem>>, %arg5: memref<8x1xf32, #tpu.memory_space<vmem>>, %arg6: memref<8x72xf32, #tpu.memory_space<vmem>>, %arg7: memref<8x1xf32, #tpu.memory_space<vmem>>, %arg8: memref<8x24xf32, #tpu.memory_space<vmem>>, %arg9: memref<8x1xf32, #tpu.memory_space<vmem>>, %arg10: memref<1x8x256xf32, #tpu.memory_space<vmem>>) attributes {dimension_semantics = [#tpu.dimension_semantics<parallel>], iteration_bounds = array<i64: 2>, scalar_prefetch = 0 : i64, scratch_operands = 0 : i64, tpu.core_type = #tpu.core_type<tc>, window_params = [{transform_indices = @transform_0, window_bounds = array<i64: 1, 4, 256>}, {pipeline_mode = #tpu.pipeline_mode<synchronous>, transform_indices = @transform_1, window_bounds = array<i64: 24, 72>}, {pipeline_mode = #tpu.pipeline_mode<synchronous>, transform_indices = @transform_2, window_bounds = array<i64: 24, 1>}, {pipeline_mode = #tpu.pipeline_mode<synchronous>, transform_indices = @transform_3, window_bounds = array<i64: 8, 72>}, {pipeline_mode = #tpu.pipeline_mode<synchronous>, transform_indices = @transform_4, window_bounds = array<i64: 8, 1>}, {pipeline_mode = #tpu.pipeline_mode<synchronous>, transform_indices = @transform_5, window_bounds = array<i64: 8, 72>}, {pipeline_mode = #tpu.pipeline_mode<synchronous>, transform_indices = @transform_6, window_bounds = array<i64: 8, 1>}, {pipeline_mode = #tpu.pipeline_mode<synchronous>, transform_indices = @transform_7, window_bounds = array<i64: 8, 24>}, {pipeline_mode = #tpu.pipeline_mode<synchronous>, transform_indices = @transform_8, window_bounds = array<i64: 8, 1>}, {transform_indices = @transform_9, window_bounds = array<i64: 1, 8, 256>}]} {
    %c0 = arith.constant 0 : index
    %c0_0 = arith.constant 0 : index
    %c0_1 = arith.constant 0 : index
    %0 = vector.load %arg1[%c0, %c0_0, %c0_1] : memref<1x4x256xf32, #tpu.memory_space<vmem>>, vector<1x4x256xf32>
    %1 = vector.shape_cast %0 : vector<1x4x256xf32> to vector<4x256xf32>
    %2 = tpu.iota {dimensions = array<i32: 1>} : vector<1x256xi32>
    %c16_i32 = arith.constant 16 : i32
    %c0_i32 = arith.constant 0 : i32
    %3 = arith.cmpi eq, %c16_i32, %c0_i32 : i32
    %c1_i32 = arith.constant 1 : i32
    %4 = arith.select %3, %c1_i32, %c16_i32 : i32
    %5 = vector.broadcast %4 : i32 to vector<1x256xi32>
    %6 = arith.remsi %2, %5 : vector<1x256xi32>
    %c0_i32_2 = arith.constant 0 : i32
    %7 = vector.broadcast %c0_i32_2 : i32 to vector<1x256xi32>
    %8 = arith.cmpi ne, %6, %7 : vector<1x256xi32>
    %c0_i32_3 = arith.constant 0 : i32
    %9 = vector.broadcast %c0_i32_3 : i32 to vector<1x256xi32>
    %10 = arith.cmpi slt, %6, %9 : vector<1x256xi32>
    %c0_i32_4 = arith.constant 0 : i32
    %11 = arith.cmpi slt, %4, %c0_i32_4 : i32
    %12 = vector.broadcast %11 : i1 to vector<1x256xi1>
    %13 = vector.broadcast %12 : vector<1x256xi1> to vector<1x256xi1>
    %14 = arith.xori %10, %13 : vector<1x256xi1>
    %15 = arith.andi %14, %8 : vector<1x256xi1>
    %16 = vector.broadcast %4 : i32 to vector<1x256xi32>
    %17 = arith.addi %6, %16 : vector<1x256xi32>
    %18 = arith.select %15, %17, %6 : vector<1x256xi1>, vector<1x256xi32>
    %cst = arith.constant 0.000000e+00 : f32
    %19 = vector.broadcast %cst : f32 to vector<4x34xf32>
    %20 = vector.extract_strided_slice %1 {offsets = [0, 0], sizes = [4, 222], strides = [1, 1]} : vector<4x256xf32> to vector<4x222xf32>
    %21 = tpu.concatenate %19, %20 in 1 : vector<4x34xf32>, vector<4x222xf32> -> vector<4x256xf32>
    %c2_i32 = arith.constant 2 : i32
    %22 = vector.broadcast %c2_i32 : i32 to vector<1x256xi32>
    %23 = arith.cmpi sge, %18, %22 : vector<1x256xi32>
    %cst_5 = arith.constant 0.000000e+00 : f32
    %24 = vector.shape_cast %23 : vector<1x256xi1> to vector<1x256xi1>
    %25 = vector.broadcast %24 : vector<1x256xi1> to vector<4x256xi1>
    %26 = vector.broadcast %cst_5 : f32 to vector<4x256xf32>
    %27 = arith.select %25, %21, %26 : vector<4x256xi1>, vector<4x256xf32>
    %cst_6 = arith.constant 0.000000e+00 : f32
    %28 = vector.broadcast %cst_6 : f32 to vector<4x68xf32>
    %29 = vector.extract_strided_slice %1 {offsets = [0, 0], sizes = [4, 188], strides = [1, 1]} : vector<4x256xf32> to vector<4x188xf32>
    %30 = tpu.concatenate %28, %29 in 1 : vector<4x68xf32>, vector<4x188xf32> -> vector<4x256xf32>
    %c4_i32 = arith.constant 4 : i32
    %31 = vector.broadcast %c4_i32 : i32 to vector<1x256xi32>
    %32 = arith.cmpi sge, %18, %31 : vector<1x256xi32>
    %cst_7 = arith.constant 0.000000e+00 : f32
    %33 = vector.shape_cast %32 : vector<1x256xi1> to vector<1x256xi1>
    %34 = vector.broadcast %33 : vector<1x256xi1> to vector<4x256xi1>
    %35 = vector.broadcast %cst_7 : f32 to vector<4x256xf32>
    %36 = arith.select %34, %30, %35 : vector<4x256xi1>, vector<4x256xf32>
    %cst_8 = arith.constant 0.000000e+00 : f32
    %37 = vector.broadcast %cst_8 : f32 to vector<4x32xf32>
    %38 = vector.extract_strided_slice %1 {offsets = [0, 0], sizes = [4, 224], strides = [1, 1]} : vector<4x256xf32> to vector<4x224xf32>
    %39 = tpu.concatenate %37, %38 in 1 : vector<4x32xf32>, vector<4x224xf32> -> vector<4x256xf32>
    %cst_9 = arith.constant 0.000000e+00 : f32
    %40 = vector.broadcast %cst_9 : f32 to vector<4x64xf32>
    %41 = vector.extract_strided_slice %1 {offsets = [0, 0], sizes = [4, 192], strides = [1, 1]} : vector<4x256xf32> to vector<4x192xf32>
    %42 = tpu.concatenate %40, %41 in 1 : vector<4x64xf32>, vector<4x192xf32> -> vector<4x256xf32>
    %cst_10 = arith.constant 0.000000e+00 : f32
    %43 = vector.broadcast %cst_10 : f32 to vector<4x30xf32>
    %44 = vector.extract_strided_slice %1 {offsets = [0, 0], sizes = [4, 226], strides = [1, 1]} : vector<4x256xf32> to vector<4x226xf32>
    %45 = tpu.concatenate %43, %44 in 1 : vector<4x30xf32>, vector<4x226xf32> -> vector<4x256xf32>
    %c14_i32 = arith.constant 14 : i32
    %46 = vector.broadcast %c14_i32 : i32 to vector<1x256xi32>
    %47 = arith.cmpi slt, %18, %46 : vector<1x256xi32>
    %cst_11 = arith.constant 0.000000e+00 : f32
    %48 = vector.shape_cast %47 : vector<1x256xi1> to vector<1x256xi1>
    %49 = vector.broadcast %48 : vector<1x256xi1> to vector<4x256xi1>
    %50 = vector.broadcast %cst_11 : f32 to vector<4x256xf32>
    %51 = arith.select %49, %45, %50 : vector<4x256xi1>, vector<4x256xf32>
    %cst_12 = arith.constant 0.000000e+00 : f32
    %52 = vector.broadcast %cst_12 : f32 to vector<4x60xf32>
    %53 = vector.extract_strided_slice %1 {offsets = [0, 0], sizes = [4, 196], strides = [1, 1]} : vector<4x256xf32> to vector<4x196xf32>
    %54 = tpu.concatenate %52, %53 in 1 : vector<4x60xf32>, vector<4x196xf32> -> vector<4x256xf32>
    %c12_i32 = arith.constant 12 : i32
    %55 = vector.broadcast %c12_i32 : i32 to vector<1x256xi32>
    %56 = arith.cmpi slt, %18, %55 : vector<1x256xi32>
    %cst_13 = arith.constant 0.000000e+00 : f32
    %57 = vector.shape_cast %56 : vector<1x256xi1> to vector<1x256xi1>
    %58 = vector.broadcast %57 : vector<1x256xi1> to vector<4x256xi1>
    %59 = vector.broadcast %cst_13 : f32 to vector<4x256xf32>
    %60 = arith.select %58, %54, %59 : vector<4x256xi1>, vector<4x256xf32>
    %cst_14 = arith.constant 0.000000e+00 : f32
    %61 = vector.broadcast %cst_14 : f32 to vector<4x2xf32>
    %62 = vector.extract_strided_slice %1 {offsets = [0, 0], sizes = [4, 254], strides = [1, 1]} : vector<4x256xf32> to vector<4x254xf32>
    %63 = tpu.concatenate %61, %62 in 1 : vector<4x2xf32>, vector<4x254xf32> -> vector<4x256xf32>
    %c2_i32_15 = arith.constant 2 : i32
    %64 = vector.broadcast %c2_i32_15 : i32 to vector<1x256xi32>
    %65 = arith.cmpi sge, %18, %64 : vector<1x256xi32>
    %cst_16 = arith.constant 0.000000e+00 : f32
    %66 = vector.shape_cast %65 : vector<1x256xi1> to vector<1x256xi1>
    %67 = vector.broadcast %66 : vector<1x256xi1> to vector<4x256xi1>
    %68 = vector.broadcast %cst_16 : f32 to vector<4x256xf32>
    %69 = arith.select %67, %63, %68 : vector<4x256xi1>, vector<4x256xf32>
    %cst_17 = arith.constant 0.000000e+00 : f32
    %70 = vector.broadcast %cst_17 : f32 to vector<4x4xf32>
    %71 = vector.extract_strided_slice %1 {offsets = [0, 0], sizes = [4, 252], strides = [1, 1]} : vector<4x256xf32> to vector<4x252xf32>
    %72 = tpu.concatenate %70, %71 in 1 : vector<4x4xf32>, vector<4x252xf32> -> vector<4x256xf32>
    %c4_i32_18 = arith.constant 4 : i32
    %73 = vector.broadcast %c4_i32_18 : i32 to vector<1x256xi32>
    %74 = arith.cmpi sge, %18, %73 : vector<1x256xi32>
    %cst_19 = arith.constant 0.000000e+00 : f32
    %75 = vector.shape_cast %74 : vector<1x256xi1> to vector<1x256xi1>
    %76 = vector.broadcast %75 : vector<1x256xi1> to vector<4x256xi1>
    %77 = vector.broadcast %cst_19 : f32 to vector<4x256xf32>
    %78 = arith.select %76, %72, %77 : vector<4x256xi1>, vector<4x256xf32>
    %cst_20 = arith.constant 0.000000e+00 : f32
    %79 = vector.broadcast %cst_20 : f32 to vector<4x2xf32>
    %80 = vector.extract_strided_slice %1 {offsets = [0, 2], sizes = [4, 254], strides = [1, 1]} : vector<4x256xf32> to vector<4x254xf32>
    %81 = tpu.concatenate %80, %79 in 1 : vector<4x254xf32>, vector<4x2xf32> -> vector<4x256xf32>
    %c14_i32_21 = arith.constant 14 : i32
    %82 = vector.broadcast %c14_i32_21 : i32 to vector<1x256xi32>
    %83 = arith.cmpi slt, %18, %82 : vector<1x256xi32>
    %cst_22 = arith.constant 0.000000e+00 : f32
    %84 = vector.shape_cast %83 : vector<1x256xi1> to vector<1x256xi1>
    %85 = vector.broadcast %84 : vector<1x256xi1> to vector<4x256xi1>
    %86 = vector.broadcast %cst_22 : f32 to vector<4x256xf32>
    %87 = arith.select %85, %81, %86 : vector<4x256xi1>, vector<4x256xf32>
    %cst_23 = arith.constant 0.000000e+00 : f32
    %88 = vector.broadcast %cst_23 : f32 to vector<4x4xf32>
    %89 = vector.extract_strided_slice %1 {offsets = [0, 4], sizes = [4, 252], strides = [1, 1]} : vector<4x256xf32> to vector<4x252xf32>
    %90 = tpu.concatenate %89, %88 in 1 : vector<4x252xf32>, vector<4x4xf32> -> vector<4x256xf32>
    %c12_i32_24 = arith.constant 12 : i32
    %91 = vector.broadcast %c12_i32_24 : i32 to vector<1x256xi32>
    %92 = arith.cmpi slt, %18, %91 : vector<1x256xi32>
    %cst_25 = arith.constant 0.000000e+00 : f32
    %93 = vector.shape_cast %92 : vector<1x256xi1> to vector<1x256xi1>
    %94 = vector.broadcast %93 : vector<1x256xi1> to vector<4x256xi1>
    %95 = vector.broadcast %cst_25 : f32 to vector<4x256xf32>
    %96 = arith.select %94, %90, %95 : vector<4x256xi1>, vector<4x256xf32>
    %cst_26 = arith.constant 0.000000e+00 : f32
    %97 = vector.broadcast %cst_26 : f32 to vector<4x30xf32>
    %98 = vector.extract_strided_slice %1 {offsets = [0, 30], sizes = [4, 226], strides = [1, 1]} : vector<4x256xf32> to vector<4x226xf32>
    %99 = tpu.concatenate %98, %97 in 1 : vector<4x226xf32>, vector<4x30xf32> -> vector<4x256xf32>
    %c2_i32_27 = arith.constant 2 : i32
    %100 = vector.broadcast %c2_i32_27 : i32 to vector<1x256xi32>
    %101 = arith.cmpi sge, %18, %100 : vector<1x256xi32>
    %cst_28 = arith.constant 0.000000e+00 : f32
    %102 = vector.shape_cast %101 : vector<1x256xi1> to vector<1x256xi1>
    %103 = vector.broadcast %102 : vector<1x256xi1> to vector<4x256xi1>
    %104 = vector.broadcast %cst_28 : f32 to vector<4x256xf32>
    %105 = arith.select %103, %99, %104 : vector<4x256xi1>, vector<4x256xf32>
    %cst_29 = arith.constant 0.000000e+00 : f32
    %106 = vector.broadcast %cst_29 : f32 to vector<4x60xf32>
    %107 = vector.extract_strided_slice %1 {offsets = [0, 60], sizes = [4, 196], strides = [1, 1]} : vector<4x256xf32> to vector<4x196xf32>
    %108 = tpu.concatenate %107, %106 in 1 : vector<4x196xf32>, vector<4x60xf32> -> vector<4x256xf32>
    %c4_i32_30 = arith.constant 4 : i32
    %109 = vector.broadcast %c4_i32_30 : i32 to vector<1x256xi32>
    %110 = arith.cmpi sge, %18, %109 : vector<1x256xi32>
    %cst_31 = arith.constant 0.000000e+00 : f32
    %111 = vector.shape_cast %110 : vector<1x256xi1> to vector<1x256xi1>
    %112 = vector.broadcast %111 : vector<1x256xi1> to vector<4x256xi1>
    %113 = vector.broadcast %cst_31 : f32 to vector<4x256xf32>
    %114 = arith.select %112, %108, %113 : vector<4x256xi1>, vector<4x256xf32>
    %cst_32 = arith.constant 0.000000e+00 : f32
    %115 = vector.broadcast %cst_32 : f32 to vector<4x32xf32>
    %116 = vector.extract_strided_slice %1 {offsets = [0, 32], sizes = [4, 224], strides = [1, 1]} : vector<4x256xf32> to vector<4x224xf32>
    %117 = tpu.concatenate %116, %115 in 1 : vector<4x224xf32>, vector<4x32xf32> -> vector<4x256xf32>
    %cst_33 = arith.constant 0.000000e+00 : f32
    %118 = vector.broadcast %cst_33 : f32 to vector<4x64xf32>
    %119 = vector.extract_strided_slice %1 {offsets = [0, 64], sizes = [4, 192], strides = [1, 1]} : vector<4x256xf32> to vector<4x192xf32>
    %120 = tpu.concatenate %119, %118 in 1 : vector<4x192xf32>, vector<4x64xf32> -> vector<4x256xf32>
    %cst_34 = arith.constant 0.000000e+00 : f32
    %121 = vector.broadcast %cst_34 : f32 to vector<4x34xf32>
    %122 = vector.extract_strided_slice %1 {offsets = [0, 34], sizes = [4, 222], strides = [1, 1]} : vector<4x256xf32> to vector<4x222xf32>
    %123 = tpu.concatenate %122, %121 in 1 : vector<4x222xf32>, vector<4x34xf32> -> vector<4x256xf32>
    %c14_i32_35 = arith.constant 14 : i32
    %124 = vector.broadcast %c14_i32_35 : i32 to vector<1x256xi32>
    %125 = arith.cmpi slt, %18, %124 : vector<1x256xi32>
    %cst_36 = arith.constant 0.000000e+00 : f32
    %126 = vector.shape_cast %125 : vector<1x256xi1> to vector<1x256xi1>
    %127 = vector.broadcast %126 : vector<1x256xi1> to vector<4x256xi1>
    %128 = vector.broadcast %cst_36 : f32 to vector<4x256xf32>
    %129 = arith.select %127, %123, %128 : vector<4x256xi1>, vector<4x256xf32>
    %cst_37 = arith.constant 0.000000e+00 : f32
    %130 = vector.broadcast %cst_37 : f32 to vector<4x68xf32>
    %131 = vector.extract_strided_slice %1 {offsets = [0, 68], sizes = [4, 188], strides = [1, 1]} : vector<4x256xf32> to vector<4x188xf32>
    %132 = tpu.concatenate %131, %130 in 1 : vector<4x188xf32>, vector<4x68xf32> -> vector<4x256xf32>
    %c12_i32_38 = arith.constant 12 : i32
    %133 = vector.broadcast %c12_i32_38 : i32 to vector<1x256xi32>
    %134 = arith.cmpi slt, %18, %133 : vector<1x256xi32>
    %cst_39 = arith.constant 0.000000e+00 : f32
    %135 = vector.shape_cast %134 : vector<1x256xi1> to vector<1x256xi1>
    %136 = vector.broadcast %135 : vector<1x256xi1> to vector<4x256xi1>
    %137 = vector.broadcast %cst_39 : f32 to vector<4x256xf32>
    %138 = arith.select %136, %132, %137 : vector<4x256xi1>, vector<4x256xf32>
    %139 = tpu.concatenate %27, %36, %39, %42, %51, %60, %69, %78, %1, %1, %87, %96, %105, %114, %117, %120 in 0 : vector<4x256xf32>, vector<4x256xf32>, vector<4x256xf32>, vector<4x256xf32>, vector<4x256xf32>, vector<4x256xf32>, vector<4x256xf32>, vector<4x256xf32>, vector<4x256xf32>, vector<4x256xf32>, vector<4x256xf32>, vector<4x256xf32>, vector<4x256xf32>, vector<4x256xf32>, vector<4x256xf32>, vector<4x256xf32> -> vector<64x256xf32>
    %140 = tpu.concatenate %129, %138 in 0 : vector<4x256xf32>, vector<4x256xf32> -> vector<8x256xf32>
    %141 = tpu.concatenate %139, %140 in 0 : vector<64x256xf32>, vector<8x256xf32> -> vector<72x256xf32>
    %c0_40 = arith.constant 0 : index
    %c0_41 = arith.constant 0 : index
    %142 = vector.load %arg2[%c0_40, %c0_41] : memref<24x72xf32, #tpu.memory_space<vmem>>, vector<24x72xf32>
    %cst_42 = arith.constant dense<0.000000e+00> : vector<24x256xf32>
    %143 = tpu.matmul %142, %141, %cst_42 {dimension_numbers = #tpu.dot_dimension_numbers<[1], [0], [0], [1], [0, 0, 1, 1], [], []>} : vector<24x72xf32>, vector<72x256xf32>, vector<24x256xf32> -> vector<24x256xf32>
    %c0_43 = arith.constant 0 : index
    %c0_44 = arith.constant 0 : index
    %144 = vector.load %arg3[%c0_43, %c0_44] : memref<24x1xf32, #tpu.memory_space<vmem>>, vector<24x1xf32>
    %145 = vector.broadcast %144 : vector<24x1xf32> to vector<24x256xf32>
    %146 = arith.addf %143, %145 : vector<24x256xf32>
    %cst_45 = arith.constant 0.000000e+00 : f32
    %147 = vector.broadcast %cst_45 : f32 to vector<24x256xf32>
    %148 = arith.maximumf %146, %147 : vector<24x256xf32>
    %149 = vector.extract_strided_slice %148 {offsets = [0, 0], sizes = [8, 256], strides = [1, 1]} : vector<24x256xf32> to vector<8x256xf32>
    %150 = vector.extract_strided_slice %148 {offsets = [8, 0], sizes = [8, 256], strides = [1, 1]} : vector<24x256xf32> to vector<8x256xf32>
    %151 = vector.extract_strided_slice %148 {offsets = [16, 0], sizes = [8, 256], strides = [1, 1]} : vector<24x256xf32> to vector<8x256xf32>
    %152 = arith.addf %149, %150 : vector<8x256xf32>
    %cst_46 = arith.constant 0.000000e+00 : f32
    %153 = vector.broadcast %cst_46 : f32 to vector<8x17xf32>
    %154 = vector.extract_strided_slice %152 {offsets = [0, 0], sizes = [8, 239], strides = [1, 1]} : vector<8x256xf32> to vector<8x239xf32>
    %155 = tpu.concatenate %153, %154 in 1 : vector<8x17xf32>, vector<8x239xf32> -> vector<8x256xf32>
    %c1_i32_47 = arith.constant 1 : i32
    %156 = vector.broadcast %c1_i32_47 : i32 to vector<1x256xi32>
    %157 = arith.cmpi sge, %18, %156 : vector<1x256xi32>
    %cst_48 = arith.constant 0.000000e+00 : f32
    %158 = vector.shape_cast %157 : vector<1x256xi1> to vector<1x256xi1>
    %159 = vector.broadcast %158 : vector<1x256xi1> to vector<8x256xi1>
    %160 = vector.broadcast %cst_48 : f32 to vector<8x256xf32>
    %161 = arith.select %159, %155, %160 : vector<8x256xi1>, vector<8x256xf32>
    %cst_49 = arith.constant 0.000000e+00 : f32
    %162 = vector.broadcast %cst_49 : f32 to vector<8x16xf32>
    %163 = vector.extract_strided_slice %152 {offsets = [0, 0], sizes = [8, 240], strides = [1, 1]} : vector<8x256xf32> to vector<8x240xf32>
    %164 = tpu.concatenate %162, %163 in 1 : vector<8x16xf32>, vector<8x240xf32> -> vector<8x256xf32>
    %cst_50 = arith.constant 0.000000e+00 : f32
    %165 = vector.broadcast %cst_50 : f32 to vector<8x15xf32>
    %166 = vector.extract_strided_slice %152 {offsets = [0, 0], sizes = [8, 241], strides = [1, 1]} : vector<8x256xf32> to vector<8x241xf32>
    %167 = tpu.concatenate %165, %166 in 1 : vector<8x15xf32>, vector<8x241xf32> -> vector<8x256xf32>
    %c15_i32 = arith.constant 15 : i32
    %168 = vector.broadcast %c15_i32 : i32 to vector<1x256xi32>
    %169 = arith.cmpi slt, %18, %168 : vector<1x256xi32>
    %cst_51 = arith.constant 0.000000e+00 : f32
    %170 = vector.shape_cast %169 : vector<1x256xi1> to vector<1x256xi1>
    %171 = vector.broadcast %170 : vector<1x256xi1> to vector<8x256xi1>
    %172 = vector.broadcast %cst_51 : f32 to vector<8x256xf32>
    %173 = arith.select %171, %167, %172 : vector<8x256xi1>, vector<8x256xf32>
    %cst_52 = arith.constant 0.000000e+00 : f32
    %174 = vector.broadcast %cst_52 : f32 to vector<8x1xf32>
    %175 = vector.extract_strided_slice %152 {offsets = [0, 0], sizes = [8, 255], strides = [1, 1]} : vector<8x256xf32> to vector<8x255xf32>
    %176 = tpu.concatenate %174, %175 in 1 : vector<8x1xf32>, vector<8x255xf32> -> vector<8x256xf32>
    %c1_i32_53 = arith.constant 1 : i32
    %177 = vector.broadcast %c1_i32_53 : i32 to vector<1x256xi32>
    %178 = arith.cmpi sge, %18, %177 : vector<1x256xi32>
    %cst_54 = arith.constant 0.000000e+00 : f32
    %179 = vector.shape_cast %178 : vector<1x256xi1> to vector<1x256xi1>
    %180 = vector.broadcast %179 : vector<1x256xi1> to vector<8x256xi1>
    %181 = vector.broadcast %cst_54 : f32 to vector<8x256xf32>
    %182 = arith.select %180, %176, %181 : vector<8x256xi1>, vector<8x256xf32>
    %cst_55 = arith.constant 0.000000e+00 : f32
    %183 = vector.broadcast %cst_55 : f32 to vector<8x1xf32>
    %184 = vector.extract_strided_slice %152 {offsets = [0, 1], sizes = [8, 255], strides = [1, 1]} : vector<8x256xf32> to vector<8x255xf32>
    %185 = tpu.concatenate %184, %183 in 1 : vector<8x255xf32>, vector<8x1xf32> -> vector<8x256xf32>
    %c15_i32_56 = arith.constant 15 : i32
    %186 = vector.broadcast %c15_i32_56 : i32 to vector<1x256xi32>
    %187 = arith.cmpi slt, %18, %186 : vector<1x256xi32>
    %cst_57 = arith.constant 0.000000e+00 : f32
    %188 = vector.shape_cast %187 : vector<1x256xi1> to vector<1x256xi1>
    %189 = vector.broadcast %188 : vector<1x256xi1> to vector<8x256xi1>
    %190 = vector.broadcast %cst_57 : f32 to vector<8x256xf32>
    %191 = arith.select %189, %185, %190 : vector<8x256xi1>, vector<8x256xf32>
    %cst_58 = arith.constant 0.000000e+00 : f32
    %192 = vector.broadcast %cst_58 : f32 to vector<8x15xf32>
    %193 = vector.extract_strided_slice %152 {offsets = [0, 15], sizes = [8, 241], strides = [1, 1]} : vector<8x256xf32> to vector<8x241xf32>
    %194 = tpu.concatenate %193, %192 in 1 : vector<8x241xf32>, vector<8x15xf32> -> vector<8x256xf32>
    %c1_i32_59 = arith.constant 1 : i32
    %195 = vector.broadcast %c1_i32_59 : i32 to vector<1x256xi32>
    %196 = arith.cmpi sge, %18, %195 : vector<1x256xi32>
    %cst_60 = arith.constant 0.000000e+00 : f32
    %197 = vector.shape_cast %196 : vector<1x256xi1> to vector<1x256xi1>
    %198 = vector.broadcast %197 : vector<1x256xi1> to vector<8x256xi1>
    %199 = vector.broadcast %cst_60 : f32 to vector<8x256xf32>
    %200 = arith.select %198, %194, %199 : vector<8x256xi1>, vector<8x256xf32>
    %cst_61 = arith.constant 0.000000e+00 : f32
    %201 = vector.broadcast %cst_61 : f32 to vector<8x16xf32>
    %202 = vector.extract_strided_slice %152 {offsets = [0, 16], sizes = [8, 240], strides = [1, 1]} : vector<8x256xf32> to vector<8x240xf32>
    %203 = tpu.concatenate %202, %201 in 1 : vector<8x240xf32>, vector<8x16xf32> -> vector<8x256xf32>
    %cst_62 = arith.constant 0.000000e+00 : f32
    %204 = vector.broadcast %cst_62 : f32 to vector<8x17xf32>
    %205 = vector.extract_strided_slice %152 {offsets = [0, 17], sizes = [8, 239], strides = [1, 1]} : vector<8x256xf32> to vector<8x239xf32>
    %206 = tpu.concatenate %205, %204 in 1 : vector<8x239xf32>, vector<8x17xf32> -> vector<8x256xf32>
    %c15_i32_63 = arith.constant 15 : i32
    %207 = vector.broadcast %c15_i32_63 : i32 to vector<1x256xi32>
    %208 = arith.cmpi slt, %18, %207 : vector<1x256xi32>
    %cst_64 = arith.constant 0.000000e+00 : f32
    %209 = vector.shape_cast %208 : vector<1x256xi1> to vector<1x256xi1>
    %210 = vector.broadcast %209 : vector<1x256xi1> to vector<8x256xi1>
    %211 = vector.broadcast %cst_64 : f32 to vector<8x256xf32>
    %212 = arith.select %210, %206, %211 : vector<8x256xi1>, vector<8x256xf32>
    %213 = tpu.concatenate %161, %164, %173, %182, %152, %191, %200, %203, %212 in 0 : vector<8x256xf32>, vector<8x256xf32>, vector<8x256xf32>, vector<8x256xf32>, vector<8x256xf32>, vector<8x256xf32>, vector<8x256xf32>, vector<8x256xf32>, vector<8x256xf32> -> vector<72x256xf32>
    %c0_65 = arith.constant 0 : index
    %c0_66 = arith.constant 0 : index
    %214 = vector.load %arg4[%c0_65, %c0_66] : memref<8x72xf32, #tpu.memory_space<vmem>>, vector<8x72xf32>
    %cst_67 = arith.constant dense<0.000000e+00> : vector<8x256xf32>
    %215 = tpu.matmul %214, %213, %cst_67 {dimension_numbers = #tpu.dot_dimension_numbers<[1], [0], [0], [1], [0, 0, 1, 1], [], []>} : vector<8x72xf32>, vector<72x256xf32>, vector<8x256xf32> -> vector<8x256xf32>
    %c0_68 = arith.constant 0 : index
    %c0_69 = arith.constant 0 : index
    %216 = vector.load %arg5[%c0_68, %c0_69] : memref<8x1xf32, #tpu.memory_space<vmem>>, vector<8x1xf32>
    %217 = vector.broadcast %216 : vector<8x1xf32> to vector<8x256xf32>
    %218 = arith.addf %215, %217 : vector<8x256xf32>
    %cst_70 = arith.constant 0.000000e+00 : f32
    %219 = vector.broadcast %cst_70 : f32 to vector<8x256xf32>
    %220 = arith.maximumf %218, %219 : vector<8x256xf32>
    %221 = arith.addf %220, %151 : vector<8x256xf32>
    %cst_71 = arith.constant 0.000000e+00 : f32
    %222 = vector.broadcast %cst_71 : f32 to vector<8x17xf32>
    %223 = vector.extract_strided_slice %221 {offsets = [0, 0], sizes = [8, 239], strides = [1, 1]} : vector<8x256xf32> to vector<8x239xf32>
    %224 = tpu.concatenate %222, %223 in 1 : vector<8x17xf32>, vector<8x239xf32> -> vector<8x256xf32>
    %c1_i32_72 = arith.constant 1 : i32
    %225 = vector.broadcast %c1_i32_72 : i32 to vector<1x256xi32>
    %226 = arith.cmpi sge, %18, %225 : vector<1x256xi32>
    %cst_73 = arith.constant 0.000000e+00 : f32
    %227 = vector.shape_cast %226 : vector<1x256xi1> to vector<1x256xi1>
    %228 = vector.broadcast %227 : vector<1x256xi1> to vector<8x256xi1>
    %229 = vector.broadcast %cst_73 : f32 to vector<8x256xf32>
    %230 = arith.select %228, %224, %229 : vector<8x256xi1>, vector<8x256xf32>
    %cst_74 = arith.constant 0.000000e+00 : f32
    %231 = vector.broadcast %cst_74 : f32 to vector<8x16xf32>
    %232 = vector.extract_strided_slice %221 {offsets = [0, 0], sizes = [8, 240], strides = [1, 1]} : vector<8x256xf32> to vector<8x240xf32>
    %233 = tpu.concatenate %231, %232 in 1 : vector<8x16xf32>, vector<8x240xf32> -> vector<8x256xf32>
    %cst_75 = arith.constant 0.000000e+00 : f32
    %234 = vector.broadcast %cst_75 : f32 to vector<8x15xf32>
    %235 = vector.extract_strided_slice %221 {offsets = [0, 0], sizes = [8, 241], strides = [1, 1]} : vector<8x256xf32> to vector<8x241xf32>
    %236 = tpu.concatenate %234, %235 in 1 : vector<8x15xf32>, vector<8x241xf32> -> vector<8x256xf32>
    %c15_i32_76 = arith.constant 15 : i32
    %237 = vector.broadcast %c15_i32_76 : i32 to vector<1x256xi32>
    %238 = arith.cmpi slt, %18, %237 : vector<1x256xi32>
    %cst_77 = arith.constant 0.000000e+00 : f32
    %239 = vector.shape_cast %238 : vector<1x256xi1> to vector<1x256xi1>
    %240 = vector.broadcast %239 : vector<1x256xi1> to vector<8x256xi1>
    %241 = vector.broadcast %cst_77 : f32 to vector<8x256xf32>
    %242 = arith.select %240, %236, %241 : vector<8x256xi1>, vector<8x256xf32>
    %cst_78 = arith.constant 0.000000e+00 : f32
    %243 = vector.broadcast %cst_78 : f32 to vector<8x1xf32>
    %244 = vector.extract_strided_slice %221 {offsets = [0, 0], sizes = [8, 255], strides = [1, 1]} : vector<8x256xf32> to vector<8x255xf32>
    %245 = tpu.concatenate %243, %244 in 1 : vector<8x1xf32>, vector<8x255xf32> -> vector<8x256xf32>
    %c1_i32_79 = arith.constant 1 : i32
    %246 = vector.broadcast %c1_i32_79 : i32 to vector<1x256xi32>
    %247 = arith.cmpi sge, %18, %246 : vector<1x256xi32>
    %cst_80 = arith.constant 0.000000e+00 : f32
    %248 = vector.shape_cast %247 : vector<1x256xi1> to vector<1x256xi1>
    %249 = vector.broadcast %248 : vector<1x256xi1> to vector<8x256xi1>
    %250 = vector.broadcast %cst_80 : f32 to vector<8x256xf32>
    %251 = arith.select %249, %245, %250 : vector<8x256xi1>, vector<8x256xf32>
    %cst_81 = arith.constant 0.000000e+00 : f32
    %252 = vector.broadcast %cst_81 : f32 to vector<8x1xf32>
    %253 = vector.extract_strided_slice %221 {offsets = [0, 1], sizes = [8, 255], strides = [1, 1]} : vector<8x256xf32> to vector<8x255xf32>
    %254 = tpu.concatenate %253, %252 in 1 : vector<8x255xf32>, vector<8x1xf32> -> vector<8x256xf32>
    %c15_i32_82 = arith.constant 15 : i32
    %255 = vector.broadcast %c15_i32_82 : i32 to vector<1x256xi32>
    %256 = arith.cmpi slt, %18, %255 : vector<1x256xi32>
    %cst_83 = arith.constant 0.000000e+00 : f32
    %257 = vector.shape_cast %256 : vector<1x256xi1> to vector<1x256xi1>
    %258 = vector.broadcast %257 : vector<1x256xi1> to vector<8x256xi1>
    %259 = vector.broadcast %cst_83 : f32 to vector<8x256xf32>
    %260 = arith.select %258, %254, %259 : vector<8x256xi1>, vector<8x256xf32>
    %cst_84 = arith.constant 0.000000e+00 : f32
    %261 = vector.broadcast %cst_84 : f32 to vector<8x15xf32>
    %262 = vector.extract_strided_slice %221 {offsets = [0, 15], sizes = [8, 241], strides = [1, 1]} : vector<8x256xf32> to vector<8x241xf32>
    %263 = tpu.concatenate %262, %261 in 1 : vector<8x241xf32>, vector<8x15xf32> -> vector<8x256xf32>
    %c1_i32_85 = arith.constant 1 : i32
    %264 = vector.broadcast %c1_i32_85 : i32 to vector<1x256xi32>
    %265 = arith.cmpi sge, %18, %264 : vector<1x256xi32>
    %cst_86 = arith.constant 0.000000e+00 : f32
    %266 = vector.shape_cast %265 : vector<1x256xi1> to vector<1x256xi1>
    %267 = vector.broadcast %266 : vector<1x256xi1> to vector<8x256xi1>
    %268 = vector.broadcast %cst_86 : f32 to vector<8x256xf32>
    %269 = arith.select %267, %263, %268 : vector<8x256xi1>, vector<8x256xf32>
    %cst_87 = arith.constant 0.000000e+00 : f32
    %270 = vector.broadcast %cst_87 : f32 to vector<8x16xf32>
    %271 = vector.extract_strided_slice %221 {offsets = [0, 16], sizes = [8, 240], strides = [1, 1]} : vector<8x256xf32> to vector<8x240xf32>
    %272 = tpu.concatenate %271, %270 in 1 : vector<8x240xf32>, vector<8x16xf32> -> vector<8x256xf32>
    %cst_88 = arith.constant 0.000000e+00 : f32
    %273 = vector.broadcast %cst_88 : f32 to vector<8x17xf32>
    %274 = vector.extract_strided_slice %221 {offsets = [0, 17], sizes = [8, 239], strides = [1, 1]} : vector<8x256xf32> to vector<8x239xf32>
    %275 = tpu.concatenate %274, %273 in 1 : vector<8x239xf32>, vector<8x17xf32> -> vector<8x256xf32>
    %c15_i32_89 = arith.constant 15 : i32
    %276 = vector.broadcast %c15_i32_89 : i32 to vector<1x256xi32>
    %277 = arith.cmpi slt, %18, %276 : vector<1x256xi32>
    %cst_90 = arith.constant 0.000000e+00 : f32
    %278 = vector.shape_cast %277 : vector<1x256xi1> to vector<1x256xi1>
    %279 = vector.broadcast %278 : vector<1x256xi1> to vector<8x256xi1>
    %280 = vector.broadcast %cst_90 : f32 to vector<8x256xf32>
    %281 = arith.select %279, %275, %280 : vector<8x256xi1>, vector<8x256xf32>
    %282 = tpu.concatenate %230, %233, %242, %251, %221, %260, %269, %272, %281 in 0 : vector<8x256xf32>, vector<8x256xf32>, vector<8x256xf32>, vector<8x256xf32>, vector<8x256xf32>, vector<8x256xf32>, vector<8x256xf32>, vector<8x256xf32>, vector<8x256xf32> -> vector<72x256xf32>
    %c0_91 = arith.constant 0 : index
    %c0_92 = arith.constant 0 : index
    %283 = vector.load %arg6[%c0_91, %c0_92] : memref<8x72xf32, #tpu.memory_space<vmem>>, vector<8x72xf32>
    %cst_93 = arith.constant dense<0.000000e+00> : vector<8x256xf32>
    %284 = tpu.matmul %283, %282, %cst_93 {dimension_numbers = #tpu.dot_dimension_numbers<[1], [0], [0], [1], [0, 0, 1, 1], [], []>} : vector<8x72xf32>, vector<72x256xf32>, vector<8x256xf32> -> vector<8x256xf32>
    %c0_94 = arith.constant 0 : index
    %c0_95 = arith.constant 0 : index
    %285 = vector.load %arg7[%c0_94, %c0_95] : memref<8x1xf32, #tpu.memory_space<vmem>>, vector<8x1xf32>
    %286 = vector.broadcast %285 : vector<8x1xf32> to vector<8x256xf32>
    %287 = arith.addf %284, %286 : vector<8x256xf32>
    %cst_96 = arith.constant 0.000000e+00 : f32
    %288 = vector.broadcast %cst_96 : f32 to vector<8x256xf32>
    %289 = arith.maximumf %287, %288 : vector<8x256xf32>
    %290 = tpu.concatenate %149, %220, %289 in 0 : vector<8x256xf32>, vector<8x256xf32>, vector<8x256xf32> -> vector<24x256xf32>
    %c0_97 = arith.constant 0 : index
    %c0_98 = arith.constant 0 : index
    %291 = vector.load %arg8[%c0_97, %c0_98] : memref<8x24xf32, #tpu.memory_space<vmem>>, vector<8x24xf32>
    %cst_99 = arith.constant dense<0.000000e+00> : vector<8x256xf32>
    %292 = tpu.matmul %291, %290, %cst_99 {dimension_numbers = #tpu.dot_dimension_numbers<[1], [0], [0], [1], [0, 0, 1, 1], [], []>} : vector<8x24xf32>, vector<24x256xf32>, vector<8x256xf32> -> vector<8x256xf32>
    %c0_100 = arith.constant 0 : index
    %c0_101 = arith.constant 0 : index
    %293 = vector.load %arg9[%c0_100, %c0_101] : memref<8x1xf32, #tpu.memory_space<vmem>>, vector<8x1xf32>
    %294 = vector.broadcast %293 : vector<8x1xf32> to vector<8x256xf32>
    %295 = arith.addf %292, %294 : vector<8x256xf32>
    %cst_102 = arith.constant 0.000000e+00 : f32
    %296 = vector.broadcast %cst_102 : f32 to vector<8x256xf32>
    %297 = arith.maximumf %295, %296 : vector<8x256xf32>
    %298 = vector.shape_cast %297 : vector<8x256xf32> to vector<1x8x256xf32>
    %c0_103 = arith.constant 0 : index
    %c0_104 = arith.constant 0 : index
    %c0_105 = arith.constant 0 : index
    %299 = vector.load %arg10[%c0_103, %c0_104, %c0_105] : memref<1x8x256xf32, #tpu.memory_space<vmem>>, vector<1x8x256xf32>
    tpu.vector_store %arg10[%c0_103, %c0_104, %c0_105], %298 {strides = array<i32>} : memref<1x8x256xf32, #tpu.memory_space<vmem>>, vector<1x8x256xf32>,
    return
  }
  func.func @transform_0(%arg0: i32) -> (i32, i32, i32) {
    %c0_i32 = arith.constant 0 : i32
    %c0_i32_0 = arith.constant 0 : i32
    %c0_i32_1 = arith.constant 0 : i32
    return %arg0, %c0_i32, %c0_i32_0 : i32, i32, i32
  }
  func.func @transform_1(%arg0: i32) -> (i32, i32) {
    %c0_i32 = arith.constant 0 : i32
    %c0_i32_0 = arith.constant 0 : i32
    %c0_i32_1 = arith.constant 0 : i32
    return %c0_i32, %c0_i32_0 : i32, i32
  }
  func.func @transform_2(%arg0: i32) -> (i32, i32) {
    %c0_i32 = arith.constant 0 : i32
    %c0_i32_0 = arith.constant 0 : i32
    %c0_i32_1 = arith.constant 0 : i32
    return %c0_i32, %c0_i32_0 : i32, i32
  }
  func.func @transform_3(%arg0: i32) -> (i32, i32) {
    %c0_i32 = arith.constant 0 : i32
    %c0_i32_0 = arith.constant 0 : i32
    %c0_i32_1 = arith.constant 0 : i32
    return %c0_i32, %c0_i32_0 : i32, i32
  }
  func.func @transform_4(%arg0: i32) -> (i32, i32) {
    %c0_i32 = arith.constant 0 : i32
    %c0_i32_0 = arith.constant 0 : i32
    %c0_i32_1 = arith.constant 0 : i32
    return %c0_i32, %c0_i32_0 : i32, i32
  }
  func.func @transform_5(%arg0: i32) -> (i32, i32) {
    %c0_i32 = arith.constant 0 : i32
    %c0_i32_0 = arith.constant 0 : i32
    %c0_i32_1 = arith.constant 0 : i32
    return %c0_i32, %c0_i32_0 : i32, i32
  }
  func.func @transform_6(%arg0: i32) -> (i32, i32) {
    %c0_i32 = arith.constant 0 : i32
    %c0_i32_0 = arith.constant 0 : i32
    %c0_i32_1 = arith.constant 0 : i32
    return %c0_i32, %c0_i32_0 : i32, i32
  }
  func.func @transform_7(%arg0: i32) -> (i32, i32) {
    %c0_i32 = arith.constant 0 : i32
    %c0_i32_0 = arith.constant 0 : i32
    %c0_i32_1 = arith.constant 0 : i32
    return %c0_i32, %c0_i32_0 : i32, i32
  }
  func.func @transform_8(%arg0: i32) -> (i32, i32) {
    %c0_i32 = arith.constant 0 : i32
    %c0_i32_0 = arith.constant 0 : i32
    %c0_i32_1 = arith.constant 0 : i32
    return %c0_i32, %c0_i32_0 : i32, i32
  }
  func.func @transform_9(%arg0: i32) -> (i32, i32, i32) {
    %c0_i32 = arith.constant 0 : i32
    %c0_i32_0 = arith.constant 0 : i32
    %c0_i32_1 = arith.constant 0 : i32
    return %arg0, %c0_i32, %c0_i32_0 : i32, i32, i32
  }
}

</mosaic_0001>

<llo_original>
// kernel: appm_forward.1
$region0: #{appm_forward.1}
  #allocation0 [shape = 'u32[]', space=smem, size = 0x4, offset = 0x4, fixed_abs, tag = 'smem constant byte address 0x4 - core index']
  #allocation1 [shape = 'u32[144,128]{1,0:T(1,128)}', space=vmem, size = 0x12000, scoped, tag = 'internal scratch']
  %s0 = inlined_call_operand.vmem [shape: f32[2,4,256], index: 0, kind: input, shape index: {}]
  %s1 = inlined_call_operand.vmem [shape: f32[24,72], index: 1, kind: input, shape index: {}]
  %s2 = inlined_call_operand.vmem [shape: f32[24,1], index: 2, kind: input, shape index: {}]
  %s3 = inlined_call_operand.vmem [shape: f32[8,72], index: 3, kind: input, shape index: {}]
  %s4 = inlined_call_operand.vmem [shape: f32[8,1], index: 4, kind: input, shape index: {}]
  %s5 = inlined_call_operand.vmem [shape: f32[8,72], index: 5, kind: input, shape index: {}]
  %s6 = inlined_call_operand.vmem [shape: f32[8,1], index: 6, kind: input, shape index: {}]
  %s7 = inlined_call_operand.vmem [shape: f32[8,24], index: 7, kind: input, shape index: {}]
  %s8 = inlined_call_operand.vmem [shape: f32[8,1], index: 8, kind: input, shape index: {}]
  %s9 = inlined_call_operand.vmem [shape: f32[2,8,256], index: 9, kind: output, shape index: {}]
  %s10 = sld [smem:[#allocation0]]
  $region69: #{appm_forward.1} parent=0
    _
  %s12 = ssub.s32 1, %s10
  %s13 = scalar_select 0, %s12, %s10
  loop: start=0, step=1, limit=4
  $region2: #{appm_forward.1} parent=0 // loop_pre_header
    _
  $region3: #{appm_forward.1} parent=0 // loop_header
    %s15 = sphi 0, %s19
    %p16 = scmp.ge.s32.totalorder %s15, 4
    %s25 = sphi 0, %s27
    %s28 = sphi 0, %s25
    %s29 = sphi 0, %s28
    %s45 = sphi 0, %s29
    %s49 = sphi 0, %s49
    %s51 = sphi 0, %s49
    %s52 = sphi 0, %s51
    %s66 = sphi 0, %s52
    %s70 = sphi 0, %s70
    %s72 = sphi 0, %s70
    %s73 = sphi 0, %s72
    %s87 = sphi 0, %s73
    %s91 = sphi 0, %s91
    %s93 = sphi 0, %s91
    %s94 = sphi 0, %s93
    %s108 = sphi 0, %s94
    %s112 = sphi 0, %s112
    %s114 = sphi 0, %s112
    %s115 = sphi 0, %s114
    %s129 = sphi 0, %s115
    %s133 = sphi 0, %s133
    %s135 = sphi 0, %s133
    %s136 = sphi 0, %s135
    %s150 = sphi 0, %s136
    %s154 = sphi 0, %s154
    %s156 = sphi 0, %s154
    %s157 = sphi 0, %s156
    %s171 = sphi 0, %s157
    %s175 = sphi 0, %s175
    %s177 = sphi 0, %s175
    %s178 = sphi 0, %s177
    %s192 = sphi 0, %s178
    %s196 = sphi 0, %s196
    %s198 = sphi 0, %s196
    %s199 = sphi 0, %s198
    %s213 = sphi 0, %s199
    %s219 = sphi 0, %s221
    %s222 = sphi 0, %s219
    %s223 = sphi 0, %s222
    %s239 = sphi 0, %s223
  $region4: #{appm_forward.1} parent=0 // loop_header_branch
    %18 = sbr.rel (%p16) target = $region8
  $region5: #{appm_forward.1} parent=0 // loop_body
    %s20 = ssub.s32 %s15, 1
    %s21 = ssub.s32 %s15, 2
    %s22 = sadd.s32 %s15, 1
    %s23 = ssub.s32 %s15, %s22
    %p24 = scmp.eq.s32.totalorder %s23, 0
    %s26 = sadd.s32 %s25, 1
    %s27 = scalar_select %p24, %s25, %s26
    %p30 = pneg %p24
    %p31 = scmp.eq.s32.totalorder %s15, 1
    %p32 = por %p30, %p31
    %p33 = scmp.ne.s32.totalorder %s25, %s28
    %p34 = scmp.eq.s32.totalorder %s15, 0
    %p35 = por %p33, %p34
    %p36 = scmp.ne.s32.totalorder %s25, %s28
    %p37 = scmp.eq.s32.totalorder %s20, 1
    %p38 = por %p36, %p37
    %p39 = scmp.ne.s32.totalorder %s28, %s29
    %p40 = scmp.eq.s32.totalorder %s20, 0
    %p41 = por %p39, %p40
    %p42 = scmp.ne.s32.totalorder %s28, %s29
    %p43 = scmp.eq.s32.totalorder %s21, 1
    %p44 = por %p42, %p43
    %p46 = scmp.ne.s32.totalorder %s29, %s45
    %p47 = scmp.eq.s32.totalorder %s21, 0
    %p48 = por %p46, %p47
    %s50 = sadd.s32 %s49, 1
    %p53 = scmp.eq.s32.totalorder %s15, 1
    %p54 = scmp.ne.s32.totalorder %s49, %s51
    %p55 = scmp.eq.s32.totalorder %s15, 0
    %p56 = por %p54, %p55
    %p57 = scmp.ne.s32.totalorder %s49, %s51
    %p58 = scmp.eq.s32.totalorder %s20, 1
    %p59 = por %p57, %p58
    %p60 = scmp.ne.s32.totalorder %s51, %s52
    %p61 = scmp.eq.s32.totalorder %s20, 0
    %p62 = por %p60, %p61
    %p63 = scmp.ne.s32.totalorder %s51, %s52
    %p64 = scmp.eq.s32.totalorder %s21, 1
    %p65 = por %p63, %p64
    %p67 = scmp.ne.s32.totalorder %s52, %s66
    %p68 = scmp.eq.s32.totalorder %s21, 0
    %p69 = por %p67, %p68
    %s71 = sadd.s32 %s70, 1
    %p74 = scmp.eq.s32.totalorder %s15, 1
    %p75 = scmp.ne.s32.totalorder %s70, %s72
    %p76 = scmp.eq.s32.totalorder %s15, 0
    %p77 = por %p75, %p76
    %p78 = scmp.ne.s32.totalorder %s70, %s72
    %p79 = scmp.eq.s32.totalorder %s20, 1
    %p80 = por %p78, %p79
    %p81 = scmp.ne.s32.totalorder %s72, %s73
    %p82 = scmp.eq.s32.totalorder %s20, 0
    %p83 = por %p81, %p82
    %p84 = scmp.ne.s32.totalorder %s72, %s73
    %p85 = scmp.eq.s32.totalorder %s21, 1
    %p86 = por %p84, %p85
    %p88 = scmp.ne.s32.totalorder %s73, %s87
    %p89 = scmp.eq.s32.totalorder %s21, 0
    %p90 = por %p88, %p89
    %s92 = sadd.s32 %s91, 1
    %p95 = scmp.eq.s32.totalorder %s15, 1
    %p96 = scmp.ne.s32.totalorder %s91, %s93
    %p97 = scmp.eq.s32.totalorder %s15, 0
    %p98 = por %p96, %p97
    %p99 = scmp.ne.s32.totalorder %s91, %s93
    %p100 = scmp.eq.s32.totalorder %s20, 1
    %p101 = por %p99, %p100
    %p102 = scmp.ne.s32.totalorder %s93, %s94
    %p103 = scmp.eq.s32.totalorder %s20, 0
    %p104 = por %p102, %p103
    %p105 = scmp.ne.s32.totalorder %s93, %s94
    %p106 = scmp.eq.s32.totalorder %s21, 1
    %p107 = por %p105, %p106
    %p109 = scmp.ne.s32.totalorder %s94, %s108
    %p110 = scmp.eq.s32.totalorder %s21, 0
    %p111 = por %p109, %p110
    %s113 = sadd.s32 %s112, 1
    %p116 = scmp.eq.s32.totalorder %s15, 1
    %p117 = scmp.ne.s32.totalorder %s112, %s114
    %p118 = scmp.eq.s32.totalorder %s15, 0
    %p119 = por %p117, %p118
    %p120 = scmp.ne.s32.totalorder %s112, %s114
    %p121 = scmp.eq.s32.totalorder %s20, 1
    %p122 = por %p120, %p121
    %p123 = scmp.ne.s32.totalorder %s114, %s115
    %p124 = scmp.eq.s32.totalorder %s20, 0
    %p125 = por %p123, %p124
    %p126 = scmp.ne.s32.totalorder %s114, %s115
    %p127 = scmp.eq.s32.totalorder %s21, 1
    %p128 = por %p126, %p127
    %p130 = scmp.ne.s32.totalorder %s115, %s129
    %p131 = scmp.eq.s32.totalorder %s21, 0
    %p132 = por %p130, %p131
    %s134 = sadd.s32 %s133, 1
    %p137 = scmp.eq.s32.totalorder %s15, 1
    %p138 = scmp.ne.s32.totalorder %s133, %s135
    %p139 = scmp.eq.s32.totalorder %s15, 0
    %p140 = por %p138, %p139
    %p141 = scmp.ne.s32.totalorder %s133, %s135
    %p142 = scmp.eq.s32.totalorder %s20, 1
    %p143 = por %p141, %p142
    %p144 = scmp.ne.s32.totalorder %s135, %s136
    %p145 = scmp.eq.s32.totalorder %s20, 0
    %p146 = por %p144, %p145
    %p147 = scmp.ne.s32.totalorder %s135, %s136
    %p148 = scmp.eq.s32.totalorder %s21, 1
    %p149 = por %p147, %p148
    %p151 = scmp.ne.s32.totalorder %s136, %s150
    %p152 = scmp.eq.s32.totalorder %s21, 0
    %p153 = por %p151, %p152
    %s155 = sadd.s32 %s154, 1
    %p158 = scmp.eq.s32.totalorder %s15, 1
    %p159 = scmp.ne.s32.totalorder %s154, %s156
    %p160 = scmp.eq.s32.totalorder %s15, 0
    %p161 = por %p159, %p160
    %p162 = scmp.ne.s32.totalorder %s154, %s156
    %p163 = scmp.eq.s32.totalorder %s20, 1
    %p164 = por %p162, %p163
    %p165 = scmp.ne.s32.totalorder %s156, %s157
    %p166 = scmp.eq.s32.totalorder %s20, 0
    %p167 = por %p165, %p166
    %p168 = scmp.ne.s32.totalorder %s156, %s157
    %p169 = scmp.eq.s32.totalorder %s21, 1
    %p170 = por %p168, %p169
    %p172 = scmp.ne.s32.totalorder %s157, %s171
    %p173 = scmp.eq.s32.totalorder %s21, 0
    %p174 = por %p172, %p173
    %s176 = sadd.s32 %s175, 1
    %p179 = scmp.eq.s32.totalorder %s15, 1
    %p180 = scmp.ne.s32.totalorder %s175, %s177
    %p181 = scmp.eq.s32.totalorder %s15, 0
    %p182 = por %p180, %p181
    %p183 = scmp.ne.s32.totalorder %s175, %s177
    %p184 = scmp.eq.s32.totalorder %s20, 1
    %p185 = por %p183, %p184
    %p186 = scmp.ne.s32.totalorder %s177, %s178
    %p187 = scmp.eq.s32.totalorder %s20, 0
    %p188 = por %p186, %p187
    %p189 = scmp.ne.s32.totalorder %s177, %s178
    %p190 = scmp.eq.s32.totalorder %s21, 1
    %p191 = por %p189, %p190
    %p193 = scmp.ne.s32.totalorder %s178, %s192
    %p194 = scmp.eq.s32.totalorder %s21, 0
    %p195 = por %p193, %p194
    %s197 = sadd.s32 %s196, 1
    %p200 = scmp.eq.s32.totalorder %s15, 1
    %p201 = scmp.ne.s32.totalorder %s196, %s198
    %p202 = scmp.eq.s32.totalorder %s15, 0
    %p203 = por %p201, %p202
    %p204 = scmp.ne.s32.totalorder %s196, %s198
    %p205 = scmp.eq.s32.totalorder %s20, 1
    %p206 = por %p204, %p205
    %p207 = scmp.ne.s32.totalorder %s198, %s199
    %p208 = scmp.eq.s32.totalorder %s20, 0
    %p209 = por %p207, %p208
    %p210 = scmp.ne.s32.totalorder %s198, %s199
    %p211 = scmp.eq.s32.totalorder %s21, 1
    %p212 = por %p210, %p211
    %p214 = scmp.ne.s32.totalorder %s199, %s213
    %p215 = scmp.eq.s32.totalorder %s21, 0
    %p216 = por %p214, %p215
    %s217 = ssub.s32 %s15, %s22
    %p218 = scmp.eq.s32.totalorder %s217, 0
    %s220 = sadd.s32 %s219, 1
    %s221 = scalar_select %p218, %s219, %s220
    %p224 = pneg %p218
    %p225 = scmp.eq.s32.totalorder %s15, 1
    %p226 = por %p224, %p225
    %p227 = scmp.ne.s32.totalorder %s219, %s222
    %p228 = scmp.eq.s32.totalorder %s15, 0
    %p229 = por %p227, %p228
    %p230 = scmp.ne.s32.totalorder %s219, %s222
    %p231 = scmp.eq.s32.totalorder %s20, 1
    %p232 = por %p230, %p231
    %p233 = scmp.ne.s32.totalorder %s222, %s223
    %p234 = scmp.eq.s32.totalorder %s20, 0
    %p235 = por %p233, %p234
    %p236 = scmp.ne.s32.totalorder %s222, %s223
    %p237 = scmp.eq.s32.totalorder %s21, 1
    %p238 = por %p236, %p237
    %p240 = scmp.ne.s32.totalorder %s223, %s239
    %p241 = scmp.eq.s32.totalorder %s21, 0
    %p242 = por %p240, %p241
    %p243 = scmp.le.s32.totalorder 1, %s15
    %p244 = scmp.lt.s32.totalorder %s15, 3
    %p245 = pnand %p243, %p244
    %p246 = pneg %p245
    // Predicated region
    $region9: #{appm_forward.1} parent=5 // pred_check
      _
    $region10: #{appm_forward.1} parent=5 // pred_check_branch
      %248 = sbr.rel (%p245) target = $region12
    $region11: #{appm_forward.1} parent=5 // pred_region
      %s249 = ssub.s32 %s15, 1
      // Predicated region
      $region13: #{appm_forward.1} parent=11 // pred_check
        %p250 = pneg %p62
      $region14: #{appm_forward.1} parent=11 // pred_check_branch
        %252 = sbr.rel (%p250) target = $region16
      $region15: #{appm_forward.1} parent=11 // pred_region
        _
      $region16: #{appm_forward.1} parent=11 // pred_fallthru
        _
      // Predicated region
      $region17: #{appm_forward.1} parent=11 // pred_check
        %p253 = pneg %p83
      $region18: #{appm_forward.1} parent=11 // pred_check_branch
        %255 = sbr.rel (%p253) target = $region20
      $region19: #{appm_forward.1} parent=11 // pred_region
        _
      $region20: #{appm_forward.1} parent=11 // pred_fallthru
        _
      // Predicated region
      $region21: #{appm_forward.1} parent=11 // pred_check
        %p256 = pneg %p104
      $region22: #{appm_forward.1} parent=11 // pred_check_branch
        %258 = sbr.rel (%p256) target = $region24
      $region23: #{appm_forward.1} parent=11 // pred_region
        _
      $region24: #{appm_forward.1} parent=11 // pred_fallthru
        _
      // Predicated region
      $region25: #{appm_forward.1} parent=11 // pred_check
        %p259 = pneg %p125
      $region26: #{appm_forward.1} parent=11 // pred_check_branch
        %261 = sbr.rel (%p259) target = $region28
      $region27: #{appm_forward.1} parent=11 // pred_region
        _
      $region28: #{appm_forward.1} parent=11 // pred_fallthru
        _
      // Predicated region
      $region29: #{appm_forward.1} parent=11 // pred_check
        %p262 = pneg %p146
      $region30: #{appm_forward.1} parent=11 // pred_check_branch
        %264 = sbr.rel (%p262) target = $region32
      $region31: #{appm_forward.1} parent=11 // pred_region
        _
      $region32: #{appm_forward.1} parent=11 // pred_fallthru
        _
      // Predicated region
      $region33: #{appm_forward.1} parent=11 // pred_check
        %p265 = pneg %p167
      $region34: #{appm_forward.1} parent=11 // pred_check_branch
        %267 = sbr.rel (%p265) target = $region36
      $region35: #{appm_forward.1} parent=11 // pred_region
        _
      $region36: #{appm_forward.1} parent=11 // pred_fallthru
        _
      // Predicated region
      $region37: #{appm_forward.1} parent=11 // pred_check
        %p268 = pneg %p188
      $region38: #{appm_forward.1} parent=11 // pred_check_branch
        %270 = sbr.rel (%p268) target = $region40
      $region39: #{appm_forward.1} parent=11 // pred_region
        _
      $region40: #{appm_forward.1} parent=11 // pred_fallthru
        _
      // Predicated region
      $region41: #{appm_forward.1} parent=11 // pred_check
        %p271 = pneg %p209
      $region42: #{appm_forward.1} parent=11 // pred_check_branch
        %273 = sbr.rel (%p271) target = $region44
      $region43: #{appm_forward.1} parent=11 // pred_region
        _
      $region44: #{appm_forward.1} parent=11 // pred_fallthru
        _
    $region12: #{appm_forward.1} parent=5 // pred_fallthru
      _
    %p274 = scmp.lt.s32.totalorder %s15, 2
    // Predicated region
    $region45: #{appm_forward.1} parent=5 // pred_check
      %p275 = pneg %p274
    $region46: #{appm_forward.1} parent=5 // pred_check_branch
      %277 = sbr.rel (%p275) target = $region48
    $region47: #{appm_forward.1} parent=5 // pred_region
      // Predicated region
      $region49: #{appm_forward.1} parent=47 // pred_check
        %p278 = pneg %p35
      $region50: #{appm_forward.1} parent=47 // pred_check_branch
        %280 = sbr.rel (%p278) target = $region52
      $region51: #{appm_forward.1} parent=47 // pred_region
        %p281 = scmp.lt.s32.totalorder %s15, 1
        %s282 = scalar_select %p281, %s15, 1
        %s283 = smul.addr %s282, 2
        %s284 = smul.addr %s283, 4
        %s285 = scalar_lea.vmem %s0, %s284
      $region52: #{appm_forward.1} parent=47 // pred_fallthru
        _
    $region48: #{appm_forward.1} parent=5 // pred_fallthru
      _
    %p286 = scmp.le.s32.totalorder 1, %s15
    %p287 = scmp.lt.s32.totalorder %s15, 3
    %p288 = pnand %p286, %p287
    %p289 = pneg %p288
    // Predicated region
    $region53: #{appm_forward.1} parent=5 // pred_check
      _
    $region54: #{appm_forward.1} parent=5 // pred_check_branch
      %291 = sbr.rel (%p288) target = $region56
    $region55: #{appm_forward.1} parent=5 // pred_region
      %s292 = ssub.s32 %s15, 1
      %p293 = scmp.lt.s32.totalorder %s20, 1
      %s294 = scalar_select %p293, %s20, 1
      %s295 = smul.addr %s294, 2
      %s296 = smul.addr %s295, 4
      %s297 = scalar_lea.vmem %s0, %s296
      %p298 = pneg %p41
      %p299 = pneg %p38
      %p300 = pneg %p62
      %p301 = pneg %p59
      %p302 = pneg %p83
      %p303 = pneg %p80
      %p304 = pneg %p104
      %p305 = pneg %p101
      %p306 = pneg %p125
      %p307 = pneg %p122
      %p308 = pneg %p146
      %p309 = pneg %p143
      %p310 = pneg %p167
      %p311 = pneg %p164
      %p312 = pneg %p188
      %p313 = pneg %p185
      %p314 = pneg %p209
      %p315 = pneg %p206
      %p316 = pneg %p235
      %p317 = pneg %p232
      %p318 = scmp.lt.s32.totalorder %s20, 1
      %s319 = scalar_select %p318, %s20, 1
      %s320 = smul.addr %s319, 2
      %s321 = smul.addr %s320, 8
      %s322 = scalar_lea.vmem %s9, %s321
      %p323 = scmp.lt.s32.totalorder %s20, 1
      %s324 = scalar_select %p323, %s20, 1
      %s325 = smul.addr %s324, 2
      %s326 = smul.addr %s325, 4
      %s327 = scalar_lea.vmem %s0, %s326
      %p328 = scmp.lt.s32.totalorder %s20, 1
      %s329 = scalar_select %p328, %s20, 1
      %s330 = smul.addr %s329, 2
      %s331 = smul.addr %s330, 8
      %s332 = scalar_lea.vmem %s9, %s331
      %v333 = vld [vmem:[%s327] sm:$0xff]
      %v334 = vlaneseq
      %v335 = vand.u32 %v334, 127
      %v336 = vadd.s32 %v335, 128
      %vm337 = vcmp.lt.s32.totalorder %v335, 0
      %v338 = vsub.s32 0, %v335
      %v339 = vsel %vm337, %v338, %v335
      %v340 = vshrl.u32 %v339, 4
      %v341 = vand.u32 %v339, 15
      %v342 = vsub.s32 0, %v341
      %v343 = vsel %vm337, %v342, %v341
      %vm344 = vcmp.lt.s32.totalorder %v336, 0
      %v345 = vsub.s32 0, %v336
      %v346 = vsel %vm344, %v345, %v336
      %v347 = vshrl.u32 %v346, 4
      %v348 = vand.u32 %v346, 15
      %v349 = vsub.s32 0, %v348
      %v350 = vsel %vm344, %v349, %v348
      %vm351 = vcmp.ne.s32.totalorder %v343, 0
      %vm352 = vcmp.ne.s32.totalorder %v350, 0
      %vm353 = vcmp.lt.s32.totalorder %v343, 0
      %vm354 = vcmp.lt.s32.totalorder %v350, 0
      %vm355 = vmand %vm353, %vm351
      %vm356 = vmand %vm354, %vm352
      %v357 = vadd.s32 %v343, 16
      %v358 = vadd.s32 %v350, 16
      %v359 = vsel %vm355, %v357, %v343
      %v360 = vsel %vm356, %v358, %v350
      %v362 = vcombine.high %v333, %v333
      %363 = vrot.lane.b32.xlu0 %v333, 34
      %v364 = vpop.permute.xlu0 %363
      %365 = vrot.lane.b32.xlu0 %v362, 34
      %v366 = vpop.permute.xlu0 %365
      %vm367 = vcmask 277504
      %v368 = vsel %vm367, %v364, %v366
      %v371 = vsel %vm367, 0.0, %v364
      %vm372 = vcmp.ge.s32.totalorder %v359, 2
      %vm373 = vcmp.ge.s32.totalorder %v360, 2
      %v374 = vsel %vm372, 1, 0
      %v375 = vsel %vm373, 1, 0
      %vm376 = vcmp.eq.s32.totalorder %v374, 1
      %vm377 = vcmp.eq.s32.totalorder %v375, 1
      %v378 = vsel %vm376, %v371, 0.0
      %v379 = vsel %vm377, %v368, 0.0
      %380 = vrot.lane.b32.xlu0 %v333, 68
      %v381 = vpop.permute.xlu0 %380
      %382 = vrot.lane.b32.xlu0 %v362, 68
      %v383 = vpop.permute.xlu0 %382
      %vm384 = vcmask 556032
      %v385 = vsel %vm384, %v381, %v383
      %v388 = vsel %vm384, 0.0, %v381
      %vm389 = vcmp.ge.s32.totalorder %v359, 4
      %vm390 = vcmp.ge.s32.totalorder %v360, 4
      %v391 = vsel %vm389, 1, 0
      %v392 = vsel %vm390, 1, 0
      %vm393 = vcmp.eq.s32.totalorder %v391, 1
      %vm394 = vcmp.eq.s32.totalorder %v392, 1
      %v395 = vsel %vm393, %v388, 0.0
      %v396 = vsel %vm394, %v385, 0.0
      %397 = vrot.lane.b32.xlu0 %v333, 32
      %v398 = vpop.permute.xlu0 %397
      %399 = vrot.lane.b32.xlu0 %v362, 32
      %v400 = vpop.permute.xlu0 %399
      %vm401 = vcmask 261120
      %v402 = vsel %vm401, %v398, %v400
      %v405 = vsel %vm401, 0.0, %v398
      %406 = vrot.lane.b32.xlu0 %v333, 64
      %v407 = vpop.permute.xlu0 %406
      %408 = vrot.lane.b32.xlu0 %v362, 64
      %v409 = vpop.permute.xlu0 %408
      %vm410 = vcmask 523264
      %v411 = vsel %vm410, %v407, %v409
      %v413 = vsel %vm410, 0.0, %v407
      %414 = vrot.lane.b32.xlu0 %v333, 30
      %v415 = vpop.permute.xlu0 %414
      %416 = vrot.lane.b32.xlu0 %v362, 30
      %v417 = vpop.permute.xlu0 %416
      %vm418 = vcmask 244736
      %v419 = vsel %vm418, %v415, %v417
      %v422 = vsel %vm418, 0.0, %v415
      %vm423 = vcmp.lt.s32.totalorder %v359, 14
      %vm424 = vcmp.lt.s32.totalorder %v360, 14
      %v425 = vsel %vm423, 1, 0
      %v426 = vsel %vm424, 1, 0
      %vm427 = vcmp.eq.s32.totalorder %v425, 1
      %vm428 = vcmp.eq.s32.totalorder %v426, 1
      %v429 = vsel %vm427, %v422, 0.0
      %v430 = vsel %vm428, %v419, 0.0
      %431 = vrot.lane.b32.xlu0 %v333, 60
      %v432 = vpop.permute.xlu0 %431
      %433 = vrot.lane.b32.xlu0 %v362, 60
      %v434 = vpop.permute.xlu0 %433
      %vm435 = vcmask 490496
      %v436 = vsel %vm435, %v432, %v434
      %v439 = vsel %vm435, 0.0, %v432
      %vm440 = vcmp.lt.s32.totalorder %v359, 12
      %vm441 = vcmp.lt.s32.totalorder %v360, 12
      %v442 = vsel %vm440, 1, 0
      %v443 = vsel %vm441, 1, 0
      %vm444 = vcmp.eq.s32.totalorder %v442, 1
      %vm445 = vcmp.eq.s32.totalorder %v443, 1
      %v446 = vsel %vm444, %v439, 0.0
      %v447 = vsel %vm445, %v436, 0.0
      %448 = vrot.lane.b32.xlu0 %v333, 2
      %v449 = vpop.permute.xlu0 %448
      %450 = vrot.lane.b32.xlu0 %v362, 2
      %v451 = vpop.permute.xlu0 %450
      %vm452 = vcmask 15360
      %v453 = vsel %vm452, %v449, %v451
      %v456 = vsel %vm452, 0.0, %v449
      %v457 = vsel %vm376, %v456, 0.0
      %v458 = vsel %vm377, %v453, 0.0
      %459 = vrot.lane.b32.xlu0 %v333, 4
      %v460 = vpop.permute.xlu0 %459
      %461 = vrot.lane.b32.xlu0 %v362, 4
      %v462 = vpop.permute.xlu0 %461
      %vm463 = vcmask 31744
      %v464 = vsel %vm463, %v460, %v462
      %v467 = vsel %vm463, 0.0, %v460
      %v468 = vsel %vm393, %v467, 0.0
      %v469 = vsel %vm394, %v464, 0.0
      %470 = vrot.lane.b32.xlu0 %v333, 126
      %v471 = vpop.permute.xlu0 %470
      %472 = vrot.lane.b32.xlu0 %v362, 126
      %v473 = vpop.permute.xlu0 %472
      %vm474 = vcmask 1031168
      %v475 = vsel %vm474, %v471, %v473
      %v478 = vsel %vm474, %v473, 0.0
      %v479 = vsel %vm427, %v475, 0.0
      %v480 = vsel %vm428, %v478, 0.0
      %481 = vrot.lane.b32.xlu0 %v333, 124
      %v482 = vpop.permute.xlu0 %481
      %483 = vrot.lane.b32.xlu0 %v362, 124
      %v484 = vpop.permute.xlu0 %483
      %vm485 = vcmask 1014784
      %v486 = vsel %vm485, %v482, %v484
      %v489 = vsel %vm485, %v484, 0.0
      %v490 = vsel %vm444, %v486, 0.0
      %v491 = vsel %vm445, %v489, 0.0
      %492 = vrot.lane.b32.xlu0 %v333, 98
      %v493 = vpop.permute.xlu0 %492
      %494 = vrot.lane.b32.xlu0 %v362, 98
      %v495 = vpop.permute.xlu0 %494
      %vm496 = vcmask 801792
      %v497 = vsel %vm496, %v493, %v495
      %v500 = vsel %vm496, %v495, 0.0
      %v501 = vsel %vm376, %v497, 0.0
      %v502 = vsel %vm377, %v500, 0.0
      %v504 = vsel %vm384, %v383, 0.0
      %v505 = vsel %vm393, %v385, 0.0
      %v506 = vsel %vm394, %v504, 0.0
      %507 = vrot.lane.b32.xlu0 %v333, 96
      %v508 = vpop.permute.xlu0 %507
      %509 = vrot.lane.b32.xlu0 %v362, 96
      %v510 = vpop.permute.xlu0 %509
      %vm511 = vcmask 785408
      %v512 = vsel %vm511, %v508, %v510
      %v515 = vsel %vm511, %v510, 0.0
      %v517 = vsel %vm410, %v409, 0.0
      %518 = vrot.lane.b32.xlu0 %v333, 94
      %v519 = vpop.permute.xlu0 %518
      %520 = vrot.lane.b32.xlu0 %v362, 94
      %v521 = vpop.permute.xlu0 %520
      %vm522 = vcmask 769024
      %v523 = vsel %vm522, %v519, %v521
      %v526 = vsel %vm522, %v521, 0.0
      %v527 = vsel %vm427, %v523, 0.0
      %v528 = vsel %vm428, %v526, 0.0
      %v530 = vsel %vm435, %v434, 0.0
      %v531 = vsel %vm444, %v436, 0.0
      %v532 = vsel %vm445, %v530, 0.0
      %v535 = vrot.slane %v395, 4
      %v536 = vrot.slane %v396, 4
      %v540 = vrot.slane %v413, 4
      %v541 = vrot.slane %v411, 4
      %v546 = vrot.slane %v446, 4
      %v547 = vrot.slane %v447, 4
      %v552 = vrot.slane %v468, 4
      %v553 = vrot.slane %v469, 4
      %v557 = vcombine.low %v333, %v333
      %v561 = vrot.slane %v490, 4
      %v562 = vrot.slane %v491, 4
      %v567 = vrot.slane %v505, 4
      %v568 = vrot.slane %v506, 4
      %v572 = vrot.slane %v517, 4
      %vm574 = vcmask 1043456
      %v575 = vsel %vm574, %v378, %v535
      %v576 = vsel %vm574, %v379, %v536
      %v577 = vsel %vm574, %v405, %v540
      %v578 = vsel %vm574, %v402, %v541
      %v579 = vsel %vm574, %v429, %v546
      %v580 = vsel %vm574, %v430, %v547
      %v581 = vsel %vm574, %v457, %v552
      %v582 = vsel %vm574, %v458, %v553
      %v583 = vsel %vm574, %v333, %v557
      %v584 = vsel %vm574, %v362, %v333
      %v585 = vsel %vm574, %v479, %v561
      %v586 = vsel %vm574, %v480, %v562
      %v587 = vsel %vm574, %v501, %v567
      %v588 = vsel %vm574, %v502, %v568
      %v589 = vsel %vm574, %v512, %v541
      %v590 = vsel %vm574, %v515, %v572
      %v593 = vrot.slane %v531, 4
      %v594 = vrot.slane %v532, 4
      %v597 = vsel %vm574, %v527, %v593
      %v598 = vsel %vm574, %v528, %v594
      %v599 = vld [vmem:[%s1] sm:$0xff]
      %v600 = vld [vmem:[%s1 + $0x8] sm:$0xff]
      %v601 = vld [vmem:[%s1 + $0x10] sm:$0xff]
      %v602 = vld [vmem:[%s2] sm:$0xff]
      %v603 = vld [vmem:[%s2 + $0x8] sm:$0xff]
      %v604 = vld [vmem:[%s2 + $0x10] sm:$0xff]
      %606 = vset.pattern.permute.xlu0 0
      %607 = vperm.xlu0 %606, %v602
      %v608 = vpop.permute.xlu0 %607
      %611 = vset.pattern.permute.xlu0 0
      %612 = vperm.xlu0 %611, %v603
      %v613 = vpop.permute.xlu0 %612
      %616 = vset.pattern.permute.xlu0 0
      %617 = vperm.xlu0 %616, %v604
      %v618 = vpop.permute.xlu0 %617
      %vm620 = vcmask 588800
      %v622 = vsel %vm620, %v599, 0
      %v625 = vsel %vm620, %v600, 0
      %v628 = vsel %vm620, %v601, 0
      %630 = vmatprep.subr.mxu0 0.0
      %631 = vmatpush1.msra.mxu0 0.0
      %632 = vmatprep.subr.mxu0 0.0
      %633 = vmatpush1.msra.mxu0 0.0
      %634 = vmatprep.subr.mxu0 0.0
      %635 = vmatpush1.msra.mxu0 0.0
      %636 = vmatprep.subr.mxu0 0.0
      %637 = vmatpush1.msra.mxu0 0.0
      %638 = vmatprep.subr.mxu0 0.0
      %639 = vmatpush1.msra.mxu0 0.0
      %640 = vmatprep.subr.mxu0 0.0
      %641 = vmatpush1.msra.mxu0 0.0
      %642 = vmatprep.subr.mxu0 0.0
      %643 = vmatpush1.msra.mxu0 0.0
      %644 = vmatprep.subr.mxu0 %v598
      %645 = vmatpush1.msra.mxu0 %v597
      %646 = vmatprep.subr.mxu0 %v590
      %647 = vmatpush1.msra.mxu0 %v589
      %648 = vmatprep.subr.mxu0 %v588
      %649 = vmatpush1.msra.mxu0 %v587
      %650 = vmatprep.subr.mxu0 %v586
      %651 = vmatpush1.msra.mxu0 %v585
      %652 = vmatprep.subr.mxu0 %v584
      %653 = vmatpush1.msra.mxu0 %v583
      %654 = vmatprep.subr.mxu0 %v582
      %655 = vmatpush1.msra.mxu0 %v581
      %656 = vmatprep.subr.mxu0 %v580
      %657 = vmatpush1.msra.mxu0 %v579
      %658 = vmatprep.subr.mxu0 %v578
      %659 = vmatpush1.msra.mxu0 %v577
      %660 = vmatprep.subr.mxu0 %v576
      %661 = vmatpush1.msra.mxu0 %v575
      %662 = vmatprep.subr.mxu0 0.0
      %663 = vmatpush2.msra.mxu0 0.0
      %664 = vmatprep.subr.mxu0 0.0
      %665 = vmatpush2.msra.mxu0 0.0
      %666 = vmatprep.subr.mxu0 0.0
      %667 = vmatpush2.msra.mxu0 0.0
      %668 = vmatprep.subr.mxu0 0.0
      %669 = vmatpush2.msra.mxu0 0.0
      %670 = vmatprep.subr.mxu0 0.0
      %671 = vmatpush2.msra.mxu0 0.0
      %672 = vmatprep.subr.mxu0 0.0
      %673 = vmatpush2.msra.mxu0 0.0
      %674 = vmatprep.subr.mxu0 0.0
      %675 = vmatpush2.msra.mxu0 0.0
      %676 = vmatprep.subr.mxu0 0.0
      %677 = vmatpush2.msra.mxu0 0.0
      %678 = vmatprep.subr.mxu0 0.0
      %679 = vmatpush2.msra.mxu0 0.0
      %680 = vmatprep.subr.mxu0 0.0
      %681 = vmatpush2.msra.mxu0 0.0
      %682 = vmatprep.subr.mxu0 0.0
      %683 = vmatpush2.msra.mxu0 0.0
      %684 = vmatprep.subr.mxu0 0.0
      %685 = vmatpush2.msra.mxu0 0.0
      %686 = vmatprep.subr.mxu0 0.0
      %687 = vmatpush2.msra.mxu0 0.0
      %688 = vmatprep.subr.mxu0 0.0
      %689 = vmatpush2.msra.mxu0 0.0
      %690 = vmatprep.subr.mxu0 0.0
      %691 = vmatpush2.msra.mxu0 0.0
      %692 = vmatprep.subr.mxu0 0.0
      %693 = vmatpush2.msra.mxu0 0.0
      %694 = vmatprep.mubr.f32.mxu0 0.0
      %695 = vmatmul.mubr.f32.gmra.mxu0 %v622
      %v696 = vpop.f32.mrf.mxu0
      %v697 = vadd.f32 %v608, %v696
      %v698 = vpop.f32.mrf.mxu0
      %v699 = vadd.f32 %v608, %v698
      %700 = vmatprep.mubr.f32.mxu0 0.0
      %701 = vmatmul.mubr.f32.gmra.mxu0 %v625
      %v702 = vpop.f32.mrf.mxu0
      %v703 = vadd.f32 %v613, %v702
      %v704 = vpop.f32.mrf.mxu0
      %v705 = vadd.f32 %v613, %v704
      %706 = vmatprep.mubr.f32.mxu0 0.0
      %707 = vmatmul.mubr.f32.gmra.mxu0 %v628
      %v708 = vpop.f32.mrf.mxu0
      %v709 = vadd.f32 %v618, %v708
      %v710 = vpop.f32.mrf.mxu0
      %v711 = vadd.f32 %v618, %v710
      %712 = vdwg.mxu0
      %v713 = vmax.f32 %v697, 0.0
      %v714 = vmax.f32 %v699, 0.0
      %v715 = vmax.f32 %v703, 0.0
      %v716 = vmax.f32 %v705, 0.0
      %v717 = vmax.f32 %v709, 0.0
      %v718 = vmax.f32 %v711, 0.0
      %v719 = vadd.f32 %v713, %v715
      %v720 = vadd.f32 %v714, %v716
      %723 = vrot.lane.b32.xlu0 %v719, 17
      %v724 = vpop.permute.xlu0 %723
      %725 = vrot.lane.b32.xlu0 %v720, 17
      %v726 = vpop.permute.xlu0 %725
      %vm727 = vcmask 138240
      %v728 = vsel %vm727, %v724, %v726
      %v731 = vsel %vm727, 0.0, %v724
      %vm732 = vcmp.ge.s32.totalorder %v359, 1
      %vm733 = vcmp.ge.s32.totalorder %v360, 1
      %v734 = vsel %vm732, 1, 0
      %v735 = vsel %vm733, 1, 0
      %vm736 = vcmp.eq.s32.totalorder %v734, 1
      %vm737 = vcmp.eq.s32.totalorder %v735, 1
      %v738 = vsel %vm736, %v731, 0.0
      %v739 = vsel %vm737, %v728, 0.0
      %740 = vrot.lane.b32.xlu0 %v719, 16
      %v741 = vpop.permute.xlu0 %740
      %742 = vrot.lane.b32.xlu0 %v720, 16
      %v743 = vpop.permute.xlu0 %742
      %vm744 = vcmask 130048
      %v745 = vsel %vm744, %v741, %v743
      %v748 = vsel %vm744, 0.0, %v741
      %749 = vrot.lane.b32.xlu0 %v719, 15
      %v750 = vpop.permute.xlu0 %749
      %751 = vrot.lane.b32.xlu0 %v720, 15
      %v752 = vpop.permute.xlu0 %751
      %vm753 = vcmask 121856
      %v754 = vsel %vm753, %v750, %v752
      %v757 = vsel %vm753, 0.0, %v750
      %vm758 = vcmp.lt.s32.totalorder %v359, 15
      %vm759 = vcmp.lt.s32.totalorder %v360, 15
      %v760 = vsel %vm758, 1, 0
      %v761 = vsel %vm759, 1, 0
      %vm762 = vcmp.eq.s32.totalorder %v760, 1
      %vm763 = vcmp.eq.s32.totalorder %v761, 1
      %v764 = vsel %vm762, %v757, 0.0
      %v765 = vsel %vm763, %v754, 0.0
      %766 = vrot.lane.b32.xlu0 %v719, 1
      %v767 = vpop.permute.xlu0 %766
      %768 = vrot.lane.b32.xlu0 %v720, 1
      %v769 = vpop.permute.xlu0 %768
      %vm770 = vcmask 7168
      %v771 = vsel %vm770, %v767, %v769
      %v774 = vsel %vm770, 0.0, %v767
      %v775 = vsel %vm736, %v774, 0.0
      %v776 = vsel %vm737, %v771, 0.0
      %777 = vrot.lane.b32.xlu0 %v719, 127
      %v778 = vpop.permute.xlu0 %777
      %779 = vrot.lane.b32.xlu0 %v720, 127
      %v780 = vpop.permute.xlu0 %779
      %vm781 = vcmask 1039360
      %v782 = vsel %vm781, %v778, %v780
      %v785 = vsel %vm781, %v780, 0.0
      %v786 = vsel %vm762, %v782, 0.0
      %v787 = vsel %vm763, %v785, 0.0
      %788 = vrot.lane.b32.xlu0 %v719, 113
      %v789 = vpop.permute.xlu0 %788
      %790 = vrot.lane.b32.xlu0 %v720, 113
      %v791 = vpop.permute.xlu0 %790
      %vm792 = vcmask 924672
      %v793 = vsel %vm792, %v789, %v791
      %v796 = vsel %vm792, %v791, 0.0
      %v797 = vsel %vm736, %v793, 0.0
      %v798 = vsel %vm737, %v796, 0.0
      %799 = vrot.lane.b32.xlu0 %v719, 112
      %v800 = vpop.permute.xlu0 %799
      %801 = vrot.lane.b32.xlu0 %v720, 112
      %v802 = vpop.permute.xlu0 %801
      %vm803 = vcmask 916480
      %v804 = vsel %vm803, %v800, %v802
      %v807 = vsel %vm803, %v802, 0.0
      %808 = vrot.lane.b32.xlu0 %v719, 111
      %v809 = vpop.permute.xlu0 %808
      %810 = vrot.lane.b32.xlu0 %v720, 111
      %v811 = vpop.permute.xlu0 %810
      %vm812 = vcmask 908288
      %v813 = vsel %vm812, %v809, %v811
      %v816 = vsel %vm812, %v811, 0.0
      %v817 = vsel %vm762, %v813, 0.0
      %v818 = vsel %vm763, %v816, 0.0
      %v819 = vld [vmem:[%s3] sm:$0xff]
      %v820 = vld [vmem:[%s4] sm:$0xff]
      %822 = vset.pattern.permute.xlu0 0
      %823 = vperm.xlu0 %822, %v820
      %v824 = vpop.permute.xlu0 %823
      %v827 = vsel %vm620, %v819, 0
      %829 = vmatprep.subr.mxu0 0.0
      %830 = vmatpush1.msra.mxu0 0.0
      %831 = vmatprep.subr.mxu0 0.0
      %832 = vmatpush1.msra.mxu0 0.0
      %833 = vmatprep.subr.mxu0 0.0
      %834 = vmatpush1.msra.mxu0 0.0
      %835 = vmatprep.subr.mxu0 0.0
      %836 = vmatpush1.msra.mxu0 0.0
      %837 = vmatprep.subr.mxu0 0.0
      %838 = vmatpush1.msra.mxu0 0.0
      %839 = vmatprep.subr.mxu0 0.0
      %840 = vmatpush1.msra.mxu0 0.0
      %841 = vmatprep.subr.mxu0 0.0
      %842 = vmatpush1.msra.mxu0 0.0
      %843 = vmatprep.subr.mxu0 %v818
      %844 = vmatpush1.msra.mxu0 %v817
      %845 = vmatprep.subr.mxu0 %v807
      %846 = vmatpush1.msra.mxu0 %v804
      %847 = vmatprep.subr.mxu0 %v798
      %848 = vmatpush1.msra.mxu0 %v797
      %849 = vmatprep.subr.mxu0 %v787
      %850 = vmatpush1.msra.mxu0 %v786
      %851 = vmatprep.subr.mxu0 %v720
      %852 = vmatpush1.msra.mxu0 %v719
      %853 = vmatprep.subr.mxu0 %v776
      %854 = vmatpush1.msra.mxu0 %v775
      %855 = vmatprep.subr.mxu0 %v765
      %856 = vmatpush1.msra.mxu0 %v764
      %857 = vmatprep.subr.mxu0 %v745
      %858 = vmatpush1.msra.mxu0 %v748
      %859 = vmatprep.subr.mxu0 %v739
      %860 = vmatpush1.msra.mxu0 %v738
      %861 = vmatprep.subr.mxu0 0.0
      %862 = vmatpush2.msra.mxu0 0.0
      %863 = vmatprep.subr.mxu0 0.0
      %864 = vmatpush2.msra.mxu0 0.0
      %865 = vmatprep.subr.mxu0 0.0
      %866 = vmatpush2.msra.mxu0 0.0
      %867 = vmatprep.subr.mxu0 0.0
      %868 = vmatpush2.msra.mxu0 0.0
      %869 = vmatprep.subr.mxu0 0.0
      %870 = vmatpush2.msra.mxu0 0.0
      %871 = vmatprep.subr.mxu0 0.0
      %872 = vmatpush2.msra.mxu0 0.0
      %873 = vmatprep.subr.mxu0 0.0
      %874 = vmatpush2.msra.mxu0 0.0
      %875 = vmatprep.subr.mxu0 0.0
      %876 = vmatpush2.msra.mxu0 0.0
      %877 = vmatprep.subr.mxu0 0.0
      %878 = vmatpush2.msra.mxu0 0.0
      %879 = vmatprep.subr.mxu0 0.0
      %880 = vmatpush2.msra.mxu0 0.0
      %881 = vmatprep.subr.mxu0 0.0
      %882 = vmatpush2.msra.mxu0 0.0
      %883 = vmatprep.subr.mxu0 0.0
      %884 = vmatpush2.msra.mxu0 0.0
      %885 = vmatprep.subr.mxu0 0.0
      %886 = vmatpush2.msra.mxu0 0.0
      %887 = vmatprep.subr.mxu0 0.0
      %888 = vmatpush2.msra.mxu0 0.0
      %889 = vmatprep.subr.mxu0 0.0
      %890 = vmatpush2.msra.mxu0 0.0
      %891 = vmatprep.subr.mxu0 0.0
      %892 = vmatpush2.msra.mxu0 0.0
      %893 = vmatprep.mubr.f32.mxu0 0.0
      %894 = vmatmul.mubr.f32.gmra.mxu0 %v827
      %v895 = vpop.f32.mrf.mxu0
      %v896 = vadd.f32 %v824, %v895
      %v897 = vpop.f32.mrf.mxu0
      %v898 = vadd.f32 %v824, %v897
      %899 = vdwg.mxu0
      %v900 = vmax.f32 %v896, 0.0
      %v901 = vmax.f32 %v898, 0.0
      %v902 = vadd.f32 %v900, %v717
      %v903 = vadd.f32 %v901, %v718
      %906 = vrot.lane.b32.xlu0 %v902, 17
      %v907 = vpop.permute.xlu0 %906
      %908 = vrot.lane.b32.xlu0 %v903, 17
      %v909 = vpop.permute.xlu0 %908
      %v910 = vsel %vm727, %v907, %v909
      %v913 = vsel %vm727, 0.0, %v907
      %v914 = vsel %vm736, %v913, 0.0
      %v915 = vsel %vm737, %v910, 0.0
      %916 = vrot.lane.b32.xlu0 %v902, 16
      %v917 = vpop.permute.xlu0 %916
      %918 = vrot.lane.b32.xlu0 %v903, 16
      %v919 = vpop.permute.xlu0 %918
      %v920 = vsel %vm744, %v917, %v919
      %v923 = vsel %vm744, 0.0, %v917
      %924 = vrot.lane.b32.xlu0 %v902, 15
      %v925 = vpop.permute.xlu0 %924
      %926 = vrot.lane.b32.xlu0 %v903, 15
      %v927 = vpop.permute.xlu0 %926
      %v928 = vsel %vm753, %v925, %v927
      %v931 = vsel %vm753, 0.0, %v925
      %v932 = vsel %vm762, %v931, 0.0
      %v933 = vsel %vm763, %v928, 0.0
      %934 = vrot.lane.b32.xlu0 %v902, 1
      %v935 = vpop.permute.xlu0 %934
      %936 = vrot.lane.b32.xlu0 %v903, 1
      %v937 = vpop.permute.xlu0 %936
      %v938 = vsel %vm770, %v935, %v937
      %v941 = vsel %vm770, 0.0, %v935
      %v942 = vsel %vm736, %v941, 0.0
      %v943 = vsel %vm737, %v938, 0.0
      %944 = vrot.lane.b32.xlu0 %v902, 127
      %v945 = vpop.permute.xlu0 %944
      %946 = vrot.lane.b32.xlu0 %v903, 127
      %v947 = vpop.permute.xlu0 %946
      %v948 = vsel %vm781, %v945, %v947
      %v951 = vsel %vm781, %v947, 0.0
      %v952 = vsel %vm762, %v948, 0.0
      %v953 = vsel %vm763, %v951, 0.0
      %954 = vrot.lane.b32.xlu0 %v902, 113
      %v955 = vpop.permute.xlu0 %954
      %956 = vrot.lane.b32.xlu0 %v903, 113
      %v957 = vpop.permute.xlu0 %956
      %v958 = vsel %vm792, %v955, %v957
      %v961 = vsel %vm792, %v957, 0.0
      %v962 = vsel %vm736, %v958, 0.0
      %v963 = vsel %vm737, %v961, 0.0
      %964 = vrot.lane.b32.xlu0 %v902, 112
      %v965 = vpop.permute.xlu0 %964
      %966 = vrot.lane.b32.xlu0 %v903, 112
      %v967 = vpop.permute.xlu0 %966
      %v968 = vsel %vm803, %v965, %v967
      %v971 = vsel %vm803, %v967, 0.0
      %972 = vrot.lane.b32.xlu0 %v902, 111
      %v973 = vpop.permute.xlu0 %972
      %974 = vrot.lane.b32.xlu0 %v903, 111
      %v975 = vpop.permute.xlu0 %974
      %v976 = vsel %vm812, %v973, %v975
      %v979 = vsel %vm812, %v975, 0.0
      %v980 = vsel %vm762, %v976, 0.0
      %v981 = vsel %vm763, %v979, 0.0
      %v982 = vld [vmem:[%s5] sm:$0xff]
      %v983 = vld [vmem:[%s6] sm:$0xff]
      %985 = vset.pattern.permute.xlu0 0
      %986 = vperm.xlu0 %985, %v983
      %v987 = vpop.permute.xlu0 %986
      %v990 = vsel %vm620, %v982, 0
      %992 = vmatprep.subr.mxu0 0.0
      %993 = vmatpush1.msra.mxu0 0.0
      %994 = vmatprep.subr.mxu0 0.0
      %995 = vmatpush1.msra.mxu0 0.0
      %996 = vmatprep.subr.mxu0 0.0
      %997 = vmatpush1.msra.mxu0 0.0
      %998 = vmatprep.subr.mxu0 0.0
      %999 = vmatpush1.msra.mxu0 0.0
      %1000 = vmatprep.subr.mxu0 0.0
      %1001 = vmatpush1.msra.mxu0 0.0
      %1002 = vmatprep.subr.mxu0 0.0
      %1003 = vmatpush1.msra.mxu0 0.0
      %1004 = vmatprep.subr.mxu0 0.0
      %1005 = vmatpush1.msra.mxu0 0.0
      %1006 = vmatprep.subr.mxu0 %v981
      %1007 = vmatpush1.msra.mxu0 %v980
      %1008 = vmatprep.subr.mxu0 %v971
      %1009 = vmatpush1.msra.mxu0 %v968
      %1010 = vmatprep.subr.mxu0 %v963
      %1011 = vmatpush1.msra.mxu0 %v962
      %1012 = vmatprep.subr.mxu0 %v953
      %1013 = vmatpush1.msra.mxu0 %v952
      %1014 = vmatprep.subr.mxu0 %v903
      %1015 = vmatpush1.msra.mxu0 %v902
      %1016 = vmatprep.subr.mxu0 %v943
      %1017 = vmatpush1.msra.mxu0 %v942
      %1018 = vmatprep.subr.mxu0 %v933
      %1019 = vmatpush1.msra.mxu0 %v932
      %1020 = vmatprep.subr.mxu0 %v920
      %1021 = vmatpush1.msra.mxu0 %v923
      %1022 = vmatprep.subr.mxu0 %v915
      %1023 = vmatpush1.msra.mxu0 %v914
      %1024 = vmatprep.subr.mxu0 0.0
      %1025 = vmatpush2.msra.mxu0 0.0
      %1026 = vmatprep.subr.mxu0 0.0
      %1027 = vmatpush2.msra.mxu0 0.0
      %1028 = vmatprep.subr.mxu0 0.0
      %1029 = vmatpush2.msra.mxu0 0.0
      %1030 = vmatprep.subr.mxu0 0.0
      %1031 = vmatpush2.msra.mxu0 0.0
      %1032 = vmatprep.subr.mxu0 0.0
      %1033 = vmatpush2.msra.mxu0 0.0
      %1034 = vmatprep.subr.mxu0 0.0
      %1035 = vmatpush2.msra.mxu0 0.0
      %1036 = vmatprep.subr.mxu0 0.0
      %1037 = vmatpush2.msra.mxu0 0.0
      %1038 = vmatprep.subr.mxu0 0.0
      %1039 = vmatpush2.msra.mxu0 0.0
      %1040 = vmatprep.subr.mxu0 0.0
      %1041 = vmatpush2.msra.mxu0 0.0
      %1042 = vmatprep.subr.mxu0 0.0
      %1043 = vmatpush2.msra.mxu0 0.0
      %1044 = vmatprep.subr.mxu0 0.0
      %1045 = vmatpush2.msra.mxu0 0.0
      %1046 = vmatprep.subr.mxu0 0.0
      %1047 = vmatpush2.msra.mxu0 0.0
      %1048 = vmatprep.subr.mxu0 0.0
      %1049 = vmatpush2.msra.mxu0 0.0
      %1050 = vmatprep.subr.mxu0 0.0
      %1051 = vmatpush2.msra.mxu0 0.0
      %1052 = vmatprep.subr.mxu0 0.0
      %1053 = vmatpush2.msra.mxu0 0.0
      %1054 = vmatprep.subr.mxu0 0.0
      %1055 = vmatpush2.msra.mxu0 0.0
      %1056 = vmatprep.mubr.f32.mxu0 0.0
      %1057 = vmatmul.mubr.f32.gmra.mxu0 %v990
      %v1058 = vpop.f32.mrf.mxu0
      %v1059 = vadd.f32 %v987, %v1058
      %v1060 = vpop.f32.mrf.mxu0
      %v1061 = vadd.f32 %v987, %v1060
      %1062 = vdwg.mxu0
      %v1063 = vmax.f32 %v1059, 0.0
      %v1064 = vmax.f32 %v1061, 0.0
      %v1065 = vld [vmem:[%s7] sm:$0xff]
      %v1066 = vld [vmem:[%s8] sm:$0xff]
      %1068 = vset.pattern.permute.xlu0 0
      %1069 = vperm.xlu0 %1068, %v1066
      %v1070 = vpop.permute.xlu0 %1069
      %vm1072 = vcmask 195584
      %v1074 = vsel %vm1072, %v1065, 0
      %1076 = vmatprep.subr.mxu0 0.0
      %1077 = vmatpush1.msra.mxu0 0.0
      %1078 = vmatprep.subr.mxu0 0.0
      %1079 = vmatpush1.msra.mxu0 0.0
      %1080 = vmatprep.subr.mxu0 0.0
      %1081 = vmatpush1.msra.mxu0 0.0
      %1082 = vmatprep.subr.mxu0 0.0
      %1083 = vmatpush1.msra.mxu0 0.0
      %1084 = vmatprep.subr.mxu0 0.0
      %1085 = vmatpush1.msra.mxu0 0.0
      %1086 = vmatprep.subr.mxu0 0.0
      %1087 = vmatpush1.msra.mxu0 0.0
      %1088 = vmatprep.subr.mxu0 0.0
      %1089 = vmatpush1.msra.mxu0 0.0
      %1090 = vmatprep.subr.mxu0 0.0
      %1091 = vmatpush1.msra.mxu0 0.0
      %1092 = vmatprep.subr.mxu0 0.0
      %1093 = vmatpush1.msra.mxu0 0.0
      %1094 = vmatprep.subr.mxu0 0.0
      %1095 = vmatpush1.msra.mxu0 0.0
      %1096 = vmatprep.subr.mxu0 0.0
      %1097 = vmatpush1.msra.mxu0 0.0
      %1098 = vmatprep.subr.mxu0 0.0
      %1099 = vmatpush1.msra.mxu0 0.0
      %1100 = vmatprep.subr.mxu0 0.0
      %1101 = vmatpush1.msra.mxu0 0.0
      %1102 = vmatprep.subr.mxu0 %v1064
      %1103 = vmatpush1.msra.mxu0 %v1063
      %1104 = vmatprep.subr.mxu0 %v901
      %1105 = vmatpush1.msra.mxu0 %v900
      %1106 = vmatprep.subr.mxu0 %v714
      %1107 = vmatpush1.msra.mxu0 %v713
      %1108 = vmatprep.subr.mxu0 0.0
      %1109 = vmatpush2.msra.mxu0 0.0
      %1110 = vmatprep.subr.mxu0 0.0
      %1111 = vmatpush2.msra.mxu0 0.0
      %1112 = vmatprep.subr.mxu0 0.0
      %1113 = vmatpush2.msra.mxu0 0.0
      %1114 = vmatprep.subr.mxu0 0.0
      %1115 = vmatpush2.msra.mxu0 0.0
      %1116 = vmatprep.subr.mxu0 0.0
      %1117 = vmatpush2.msra.mxu0 0.0
      %1118 = vmatprep.subr.mxu0 0.0
      %1119 = vmatpush2.msra.mxu0 0.0
      %1120 = vmatprep.subr.mxu0 0.0
      %1121 = vmatpush2.msra.mxu0 0.0
      %1122 = vmatprep.subr.mxu0 0.0
      %1123 = vmatpush2.msra.mxu0 0.0
      %1124 = vmatprep.subr.mxu0 0.0
      %1125 = vmatpush2.msra.mxu0 0.0
      %1126 = vmatprep.subr.mxu0 0.0
      %1127 = vmatpush2.msra.mxu0 0.0
      %1128 = vmatprep.subr.mxu0 0.0
      %1129 = vmatpush2.msra.mxu0 0.0
      %1130 = vmatprep.subr.mxu0 0.0
      %1131 = vmatpush2.msra.mxu0 0.0
      %1132 = vmatprep.subr.mxu0 0.0
      %1133 = vmatpush2.msra.mxu0 0.0
      %1134 = vmatprep.subr.mxu0 0.0
      %1135 = vmatpush2.msra.mxu0 0.0
      %1136 = vmatprep.subr.mxu0 0.0
      %1137 = vmatpush2.msra.mxu0 0.0
      %1138 = vmatprep.subr.mxu0 0.0
      %1139 = vmatpush2.msra.mxu0 0.0
      %1140 = vmatprep.mubr.f32.mxu0 0.0
      %1141 = vmatmul.mubr.f32.gmra.mxu0 %v1074
      %v1142 = vpop.f32.mrf.mxu0
      %v1143 = vadd.f32 %v1070, %v1142
      %v1144 = vpop.f32.mrf.mxu0
      %v1145 = vadd.f32 %v1070, %v1144
      %1146 = vdwg.mxu0
      %v1147 = vmax.f32 %v1143, 0.0
      %v1148 = vmax.f32 %v1145, 0.0
      %1149 = vst [vmem:[%s332] sm:$0xff] %v1147
      %1150 = vst [vmem:[%s332 + $0x8] sm:$0xff] %v1148
      %p1151 = scmp.lt.s32.totalorder %s20, 1
      %s1152 = scalar_select %p1151, %s20, 1
      %s1153 = smul.addr %s1152, 2
      %s1154 = smul.addr %s1153, 8
      %s1155 = scalar_lea.vmem %s9, %s1154
      // Predicated region
      $region57: #{appm_forward.1} parent=55 // pred_check
        %p1156 = pneg %p232
      $region58: #{appm_forward.1} parent=55 // pred_check_branch
        %1158 = sbr.rel (%p1156) target = $region60
      $region59: #{appm_forward.1} parent=55 // pred_region
        _
      $region60: #{appm_forward.1} parent=55 // pred_fallthru
        _
    $region56: #{appm_forward.1} parent=5 // pred_fallthru
      _
    %p1159 = scmp.le.s32.totalorder 2, %s15
    // Predicated region
    $region61: #{appm_forward.1} parent=5 // pred_check
      %p1160 = pneg %p1159
    $region62: #{appm_forward.1} parent=5 // pred_check_branch
      %1162 = sbr.rel (%p1160) target = $region64
    $region63: #{appm_forward.1} parent=5 // pred_region
      %s1163 = ssub.s32 %s15, 2
      // Predicated region
      $region65: #{appm_forward.1} parent=63 // pred_check
        %p1164 = pneg %p238
      $region66: #{appm_forward.1} parent=63 // pred_check_branch
        %1166 = sbr.rel (%p1164) target = $region68
      $region67: #{appm_forward.1} parent=63 // pred_region
        %p1167 = scmp.lt.s32.totalorder %s21, 1
        %s1168 = scalar_select %p1167, %s21, 1
        %s1169 = smul.addr %s1168, 2
        %s1170 = smul.addr %s1169, 8
        %s1171 = scalar_lea.vmem %s9, %s1170
      $region68: #{appm_forward.1} parent=63 // pred_fallthru
        _
    $region64: #{appm_forward.1} parent=5 // pred_fallthru
      _
  $region6: #{appm_forward.1} parent=0 // loop_footer
    %s19 = sadd.s32 1, %s15
  $region7: #{appm_forward.1} parent=0 // loop_footer_branch
    %14 = sbr.rel target = $region3
  $region8: #{appm_forward.1} parent=0 // loop_exit
    _

</llo_original>
